<compile_context>
chip_gen: v7x
topology: tpu7x:2x2x1
jax: 0.10.0
libtpu: 0.0.40
codegen_flags: <defaults>
</compile_context>

<pallas_src>
import functools
import math

import jax
import jax.numpy as jnp
from jax.experimental import pallas as pl
from jax.experimental.pallas import tpu as pltpu


# ------------------------------------------------------------------ kernel ---

def _block_kernel(x_ref, cos_ref, sin_ref,
                  ln1_w_ref, ln1_b_ref, wqkv_ref, wout_ref,
                  ln2_w_ref, ln2_b_ref, wup_ref, wdown_ref,
                  o_ref, *, n_heads, head_dim):
    f32 = jnp.float32
    bf16 = jnp.bfloat16
    eps = 1e-5
    rot = head_dim // 4
    scale = 1.0 / math.sqrt(head_dim)

    x = x_ref[...]                       # (S, D) f32 — one sequence per grid step
    S, D = x.shape
    H = wdown_ref.shape[0]

    def layernorm(v, w, b):
        mu = jnp.mean(v, axis=-1, keepdims=True)
        var = jnp.mean(jnp.square(v - mu), axis=-1, keepdims=True)  # biased, torch LN
        return (v - mu) * jax.lax.rsqrt(var + eps) * w + b

    # ---------------- attention branch ----------------
    h = layernorm(x, ln1_w_ref[...], ln1_b_ref[...])
    qkv = jnp.dot(h.astype(bf16), wqkv_ref[...], preferred_element_type=f32)  # (S, 3D)

    q = qkv[:, :D] * scale               # attention scale applied in f32
    k = qkv[:, D:2 * D]
    v = qkv[:, 2 * D:]

    def split_heads(t):                  # (S, D) f32 -> (nh, S, hd) f32
        t = t.reshape(S, n_heads, head_dim)
        return pltpu.einshape("mhd->hmd", t)

    q3 = split_heads(q)
    k3 = split_heads(k)
    v3 = split_heads(v).astype(bf16)

    # axial RoPE in f32; tables are (S, rot) and broadcast over heads.
    c = cos_ref[...][None, :, :]         # (1, S, rot)
    s_tab = sin_ref[...][None, :, :]     # (1, S, rot)

    def rope(t):                         # (nh, S, hd) f32
        t1 = t[..., :rot]
        t2 = t[..., rot:2 * rot]
        tr = t[..., 2 * rot:]
        return jnp.concatenate(
            [t1 * c - t2 * s_tab, t2 * c + t1 * s_tab, tr], axis=-1)

    q3 = rope(q3).astype(bf16)
    k3 = rope(k3).astype(bf16)

    # heads batched into single MXU dots; causal mask built in-kernel (finite fill).
    s = jnp.einsum("hqd,hkd->hqk", q3, k3, preferred_element_type=f32)  # (nh, S, S)
    row = jax.lax.broadcasted_iota(jnp.int32, (S, S), 0)
    col = jax.lax.broadcasted_iota(jnp.int32, (S, S), 1)
    s = jnp.where((col <= row)[None, :, :], s, -1e30)

    m = jnp.max(s, axis=-1, keepdims=True)
    e = jnp.exp(s - m)
    p = e * pl.reciprocal(jnp.sum(e, axis=-1, keepdims=True), approx=True)

    attn = jnp.einsum("hqk,hkd->hqd", p.astype(bf16), v3,
                      preferred_element_type=f32)                       # (nh, S, hd)

    # merge heads (static per-head concat; pure XLU lane work) and do the
    # output projection as a single K=D matmul.
    attn_m = jnp.concatenate([attn[hh] for hh in range(n_heads)], axis=-1)  # (S, D)
    x1 = x + jnp.dot(attn_m.astype(bf16), wout_ref[...],
                     preferred_element_type=f32)

    # ---------------- feed-forward branch ----------------
    h2 = layernorm(x1, ln2_w_ref[...], ln2_b_ref[...])
    u = jnp.dot(h2.astype(bf16), wup_ref[...], preferred_element_type=f32)  # (S, 2H)
    a = u[:, :H]
    g = u[:, H:]
    ff_h = a * (g * jax.nn.sigmoid(g))                                  # swiglu (f32)
    ff = jnp.dot(ff_h.astype(bf16), wdown_ref[...], preferred_element_type=f32)

    o_ref[...] = x1 + ff


# ---------------------------------------------------------------- wrapper ----

def make_theta_table(head_dim):
    """Replicates SelfAttention.__init__ theta buffer: shape (1 + 32*32, head_dim//4)."""
    n_freq = head_dim // 8
    log_min = math.log(math.pi)
    log_max = math.log(10 * math.pi)
    freqs = jnp.exp(jnp.linspace(log_min, log_max, n_freq + 1)[:-1])
    grid = jnp.linspace(-1.0, 1.0, 32 + 1)
    centers = (grid[:-1] + grid[1:]) / 2
    hh, ww = jnp.meshgrid(centers, centers, indexing="ij")
    pos = jnp.stack([hh, ww], axis=-1).reshape(32 * 32, 2)
    pos = jnp.concatenate([jnp.zeros((1, 2)), pos], axis=0)              # (1025, 2)
    theta_h = pos[:, 0:1] * freqs
    theta_w = pos[:, 1:2] * freqs
    return jnp.concatenate([theta_h, theta_w], axis=-1)                  # (1025, head_dim//4)


def block_forward(x, pos, params, *, head_dim):
    B, S, D = x.shape
    BS = B * S
    nh = D // head_dim
    rot = head_dim // 4
    H = params["wdown"].shape[0]

    # ---- glue: tiny rotary tables, (B*S, rot) f32 (no pre-tiling to D) ----
    th = params["theta"][pos]                                            # (B, S, rot)
    cos = jnp.cos(th).reshape(BS, rot).astype(jnp.float32)
    sin = jnp.sin(th).reshape(BS, rot).astype(jnp.float32)

    # ---- weights: bf16 matmul operands, f32 accumulation in-kernel ----
    wqkv = params["wqkv"].astype(jnp.bfloat16)                           # (D, 3D)
    wout = params["wout"].astype(jnp.bfloat16)                           # (D, D)
    wup = params["wup"].astype(jnp.bfloat16)                             # (D, 2H)
    wdown = params["wdown"].astype(jnp.bfloat16)                         # (H, D)

    x2d = x.reshape(BS, D).astype(jnp.float32)

    kernel = functools.partial(_block_kernel, n_heads=nh, head_dim=head_dim)

    seq = lambda last: pl.BlockSpec((S, last), lambda b: (b, 0))         # per-sequence tiles
    resident = lambda shape: pl.BlockSpec(shape, lambda b: (0, 0))       # weights stay in VMEM

    out = pl.pallas_call(
        kernel,
        grid=(B,),
        out_shape=jax.ShapeDtypeStruct((BS, D), jnp.float32),
        in_specs=[
            seq(D),                       # x
            seq(rot),                     # cos
            seq(rot),                     # sin
            resident((1, D)),             # ln1_w
            resident((1, D)),             # ln1_b
            resident((D, 3 * D)),         # wqkv
            resident((D, D)),             # wout
            resident((1, D)),             # ln2_w
            resident((1, D)),             # ln2_b
            resident((D, 2 * H)),         # wup
            resident((H, D)),             # wdown
        ],
        out_specs=seq(D),
        compiler_params=pltpu.CompilerParams(
            dimension_semantics=("parallel",),
            vmem_limit_bytes=48 * 1024 * 1024,   # stays under v7x's 64 MiB VMEM
        ),
    )(x2d, cos, sin,
      params["ln1_w"], params["ln1_b"], wqkv, wout,
      params["ln2_w"], params["ln2_b"], wup, wdown)

    return out.reshape(B, S, D)


# ------------------------------------------------------------ reference ------

def block_forward_ref(x, pos, params, *, head_dim):
    B, S, D = x.shape
    nh = D // head_dim
    rot = head_dim // 4
    eps = 1e-5

    def ln(v, w, b):
        mu = jnp.mean(v, axis=-1, keepdims=True)
        var = jnp.mean((v - mu) ** 2, axis=-1, keepdims=True)
        return (v - mu) / jnp.sqrt(var + eps) * w[0] + b[0]

    th = params["theta"][pos]                               # (B, S, rot)
    cos, sin = jnp.cos(th), jnp.sin(th)

    h = ln(x, params["ln1_w"], params["ln1_b"])
    qkv = (h @ params["wqkv"]).reshape(B, S, 3, nh, head_dim)
    q, k, v = qkv[:, :, 0], qkv[:, :, 1], qkv[:, :, 2]      # (B, S, nh, hd)

    def rope(t):
        t1, t2, r = t[..., :rot], t[..., rot:2 * rot], t[..., 2 * rot:]
        c, s = cos[:, :, None, :], sin[:, :, None, :]
        return jnp.concatenate([t1 * c - t2 * s, t2 * c + t1 * s, r], axis=-1)

    q, k = rope(q), rope(k)
    scores = jnp.einsum("bqhd,bkhd->bhqk", q, k) / math.sqrt(head_dim)
    mask = jnp.tril(jnp.ones((S, S), bool))
    scores = jnp.where(mask, scores, -jnp.inf)
    p = jax.nn.softmax(scores, axis=-1)
    o = jnp.einsum("bhqk,bkhd->bqhd", p, v).reshape(B, S, D)
    x1 = x + o @ params["wout"]

    h2 = ln(x1, params["ln2_w"], params["ln2_b"])
    u = h2 @ params["wup"]
    Hd = u.shape[-1] // 2
    a, g = u[..., :Hd], u[..., Hd:]
    return x1 + (a * (g * jax.nn.sigmoid(g))) @ params["wdown"]


# ---------------------------------------------------------------- main -------

if __name__ == "__main__":
    B, S = 2, 16
    dim, hidden_dim, head_dim = 128, 256, 32

    key = jax.random.PRNGKey(0)
    ks = jax.random.split(key, 8)

    params = {
        "ln1_w": jnp.ones((1, dim), jnp.float32),
        "ln1_b": jnp.zeros((1, dim), jnp.float32),
        "wqkv": (jax.random.normal(ks[0], (dim, 3 * dim)) * 0.02).astype(jnp.float32),
        # original module zero-inits out_proj / down; use small random values
        # so the kernel does observable work (forward semantics unchanged).
        "wout": (jax.random.normal(ks[1], (dim, dim)) * 0.02).astype(jnp.float32),
        "ln2_w": jnp.ones((1, dim), jnp.float32),
        "ln2_b": jnp.zeros((1, dim), jnp.float32),
        "wup": (jax.random.normal(ks[2], (dim, 2 * hidden_dim)) * 0.02).astype(jnp.float32),
        "wdown": (jax.random.normal(ks[3], (hidden_dim, dim)) * 0.02).astype(jnp.float32),
        "theta": make_theta_table(head_dim).astype(jnp.float32),
    }

    x = jax.random.normal(ks[4], (B, S, dim), jnp.float32)
    pos = jnp.broadcast_to(jnp.arange(S, dtype=jnp.int32)[None, :], (B, S))

    out = jax.block_until_ready(block_forward(x, pos, params, head_dim=head_dim))
    ref = block_forward_ref(x, pos, params, head_dim=head_dim)

    assert out.shape == (B, S, dim)
    err = float(jnp.max(jnp.abs(out - ref)))
    # tolerance covers bf16 matmul inputs + approx reciprocal in softmax
    assert jnp.allclose(out, ref, atol=1e-2, rtol=1e-2), f"mismatch vs reference (max abs err {err})"

    print("KERNEL_OK")
</pallas_src>

<mosaic_0001>
module attributes {stable_mosaic.version = 11 : i64} {
  func.func @_block_kernel(%arg0: i32, %arg1: memref<16x128xf32, #tpu.memory_space<vmem>>, %arg2: memref<16x8xf32, #tpu.memory_space<vmem>>, %arg3: memref<16x8xf32, #tpu.memory_space<vmem>>, %arg4: memref<1x128xf32, #tpu.memory_space<vmem>>, %arg5: memref<1x128xf32, #tpu.memory_space<vmem>>, %arg6: memref<128x384xbf16, #tpu.memory_space<vmem>>, %arg7: memref<128x128xbf16, #tpu.memory_space<vmem>>, %arg8: memref<1x128xf32, #tpu.memory_space<vmem>>, %arg9: memref<1x128xf32, #tpu.memory_space<vmem>>, %arg10: memref<128x512xbf16, #tpu.memory_space<vmem>>, %arg11: memref<256x128xbf16, #tpu.memory_space<vmem>>, %arg12: memref<16x128xf32, #tpu.memory_space<vmem>>) attributes {dimension_semantics = [#tpu.dimension_semantics<parallel>], iteration_bounds = array<i64: 2>, scalar_prefetch = 0 : i64, scratch_operands = 0 : i64, tpu.core_type = #tpu.core_type<tc>, window_params = [{transform_indices = @transform_0, window_bounds = array<i64: 16, 128>}, {transform_indices = @transform_1, window_bounds = array<i64: 16, 8>}, {transform_indices = @transform_2, window_bounds = array<i64: 16, 8>}, {pipeline_mode = #tpu.pipeline_mode<synchronous>, transform_indices = @transform_3, window_bounds = array<i64: 1, 128>}, {pipeline_mode = #tpu.pipeline_mode<synchronous>, transform_indices = @transform_4, window_bounds = array<i64: 1, 128>}, {pipeline_mode = #tpu.pipeline_mode<synchronous>, transform_indices = @transform_5, window_bounds = array<i64: 128, 384>}, {pipeline_mode = #tpu.pipeline_mode<synchronous>, transform_indices = @transform_6, window_bounds = array<i64: 128, 128>}, {pipeline_mode = #tpu.pipeline_mode<synchronous>, transform_indices = @transform_7, window_bounds = array<i64: 1, 128>}, {pipeline_mode = #tpu.pipeline_mode<synchronous>, transform_indices = @transform_8, window_bounds = array<i64: 1, 128>}, {pipeline_mode = #tpu.pipeline_mode<synchronous>, transform_indices = @transform_9, window_bounds = array<i64: 128, 512>}, {pipeline_mode = #tpu.pipeline_mode<synchronous>, transform_indices = @transform_10, window_bounds = array<i64: 256, 128>}, {transform_indices = @transform_11, window_bounds = array<i64: 16, 128>}]} {
    %c0 = arith.constant 0 : index
    %c0_0 = arith.constant 0 : index
    %0 = vector.load %arg1[%c0, %c0_0] : memref<16x128xf32, #tpu.memory_space<vmem>>, vector<16x128xf32>
    %c0_1 = arith.constant 0 : index
    %c0_2 = arith.constant 0 : index
    %1 = vector.load %arg4[%c0_1, %c0_2] : memref<1x128xf32, #tpu.memory_space<vmem>>, vector<1x128xf32>
    %c0_3 = arith.constant 0 : index
    %c0_4 = arith.constant 0 : index
    %2 = vector.load %arg5[%c0_3, %c0_4] : memref<1x128xf32, #tpu.memory_space<vmem>>, vector<1x128xf32>
    %cst = arith.constant dense<0.000000e+00> : vector<16xf32>
    %3 = vector.multi_reduction <add>, %0, %cst [1] : vector<16x128xf32> to vector<16xf32>
    %4 = vector.shape_cast %3 : vector<16xf32> to vector<16x1xf32>
    %cst_5 = arith.constant 1.280000e+02 : f32
    %5 = vector.broadcast %cst_5 : f32 to vector<16x1xf32>
    %6 = arith.divf %4, %5 : vector<16x1xf32>
    %7 = vector.broadcast %6 : vector<16x1xf32> to vector<16x128xf32>
    %8 = arith.subf %0, %7 : vector<16x128xf32>
    %9 = arith.mulf %8, %8 : vector<16x128xf32>
    %cst_6 = arith.constant dense<0.000000e+00> : vector<16xf32>
    %10 = vector.multi_reduction <add>, %9, %cst_6 [1] : vector<16x128xf32> to vector<16xf32>
    %11 = vector.shape_cast %10 : vector<16xf32> to vector<16x1xf32>
    %cst_7 = arith.constant 1.280000e+02 : f32
    %12 = vector.broadcast %cst_7 : f32 to vector<16x1xf32>
    %13 = arith.divf %11, %12 : vector<16x1xf32>
    %14 = vector.broadcast %6 : vector<16x1xf32> to vector<16x128xf32>
    %15 = arith.subf %0, %14 : vector<16x128xf32>
    %cst_8 = arith.constant 9.99999974E-6 : f32
    %16 = vector.broadcast %cst_8 : f32 to vector<16x1xf32>
    %17 = arith.addf %13, %16 : vector<16x1xf32>
    %18 = math.rsqrt %17 : vector<16x1xf32>
    %19 = vector.broadcast %18 : vector<16x1xf32> to vector<16x128xf32>
    %20 = arith.mulf %15, %19 : vector<16x128xf32>
    %21 = vector.broadcast %1 : vector<1x128xf32> to vector<16x128xf32>
    %22 = arith.mulf %20, %21 : vector<16x128xf32>
    %23 = vector.broadcast %2 : vector<1x128xf32> to vector<16x128xf32>
    %24 = arith.addf %22, %23 : vector<16x128xf32>
    %25 = arith.truncf %24 : vector<16x128xf32> to vector<16x128xbf16>
    %c0_9 = arith.constant 0 : index
    %c0_10 = arith.constant 0 : index
    %26 = vector.load %arg6[%c0_9, %c0_10] : memref<128x384xbf16, #tpu.memory_space<vmem>>, vector<128x384xbf16>
    %cst_11 = arith.constant dense<0.000000e+00> : vector<16x384xf32>
    %27 = tpu.matmul %25, %26, %cst_11 {dimension_numbers = #tpu.dot_dimension_numbers<[1], [0], [0], [1], [0, 0, 1, 1], [], []>} : vector<16x128xbf16>, vector<128x384xbf16>, vector<16x384xf32> -> vector<16x384xf32>
    %28 = vector.extract_strided_slice %27 {offsets = [0, 0], sizes = [16, 128], strides = [1, 1]} : vector<16x384xf32> to vector<16x128xf32>
    %cst_12 = arith.constant 0.176776692 : f32
    %29 = vector.broadcast %cst_12 : f32 to vector<16x128xf32>
    %30 = arith.mulf %28, %29 : vector<16x128xf32>
    %31 = vector.extract_strided_slice %27 {offsets = [0, 128], sizes = [16, 128], strides = [1, 1]} : vector<16x384xf32> to vector<16x128xf32>
    %32 = vector.extract_strided_slice %27 {offsets = [0, 256], sizes = [16, 128], strides = [1, 1]} : vector<16x384xf32> to vector<16x128xf32>
    %33 = vector.shape_cast %30 : vector<16x128xf32> to vector<16x4x32xf32>
    %34 = tpu.transpose %33, [1, 0, 2] : vector<16x4x32xf32> -> vector<4x16x32xf32>
    %35 = vector.shape_cast %31 : vector<16x128xf32> to vector<16x4x32xf32>
    %36 = tpu.transpose %35, [1, 0, 2] : vector<16x4x32xf32> -> vector<4x16x32xf32>
    %37 = vector.shape_cast %32 : vector<16x128xf32> to vector<16x4x32xf32>
    %38 = tpu.transpose %37, [1, 0, 2] : vector<16x4x32xf32> -> vector<4x16x32xf32>
    %39 = arith.truncf %38 : vector<4x16x32xf32> to vector<4x16x32xbf16>
    %c0_13 = arith.constant 0 : index
    %c0_14 = arith.constant 0 : index
    %40 = vector.load %arg2[%c0_13, %c0_14] : memref<16x8xf32, #tpu.memory_space<vmem>>, vector<16x8xf32>
    %41 = vector.shape_cast %40 : vector<16x8xf32> to vector<1x16x8xf32>
    %c0_15 = arith.constant 0 : index
    %c0_16 = arith.constant 0 : index
    %42 = vector.load %arg3[%c0_15, %c0_16] : memref<16x8xf32, #tpu.memory_space<vmem>>, vector<16x8xf32>
    %43 = vector.shape_cast %42 : vector<16x8xf32> to vector<1x16x8xf32>
    %44 = vector.extract_strided_slice %34 {offsets = [0, 0, 0], sizes = [4, 16, 8], strides = [1, 1, 1]} : vector<4x16x32xf32> to vector<4x16x8xf32>
    %45 = vector.extract_strided_slice %34 {offsets = [0, 0, 8], sizes = [4, 16, 8], strides = [1, 1, 1]} : vector<4x16x32xf32> to vector<4x16x8xf32>
    %46 = vector.extract_strided_slice %34 {offsets = [0, 0, 16], sizes = [4, 16, 16], strides = [1, 1, 1]} : vector<4x16x32xf32> to vector<4x16x16xf32>
    %47 = vector.broadcast %41 : vector<1x16x8xf32> to vector<4x16x8xf32>
    %48 = arith.mulf %44, %47 : vector<4x16x8xf32>
    %49 = vector.broadcast %43 : vector<1x16x8xf32> to vector<4x16x8xf32>
    %50 = arith.mulf %45, %49 : vector<4x16x8xf32>
    %51 = arith.subf %48, %50 : vector<4x16x8xf32>
    %52 = vector.broadcast %41 : vector<1x16x8xf32> to vector<4x16x8xf32>
    %53 = arith.mulf %45, %52 : vector<4x16x8xf32>
    %54 = vector.broadcast %43 : vector<1x16x8xf32> to vector<4x16x8xf32>
    %55 = arith.mulf %44, %54 : vector<4x16x8xf32>
    %56 = arith.addf %53, %55 : vector<4x16x8xf32>
    %57 = tpu.concatenate %51, %56, %46 in 2 : vector<4x16x8xf32>, vector<4x16x8xf32>, vector<4x16x16xf32> -> vector<4x16x32xf32>
    %58 = arith.truncf %57 : vector<4x16x32xf32> to vector<4x16x32xbf16>
    %59 = vector.extract_strided_slice %36 {offsets = [0, 0, 0], sizes = [4, 16, 8], strides = [1, 1, 1]} : vector<4x16x32xf32> to vector<4x16x8xf32>
    %60 = vector.extract_strided_slice %36 {offsets = [0, 0, 8], sizes = [4, 16, 8], strides = [1, 1, 1]} : vector<4x16x32xf32> to vector<4x16x8xf32>
    %61 = vector.extract_strided_slice %36 {offsets = [0, 0, 16], sizes = [4, 16, 16], strides = [1, 1, 1]} : vector<4x16x32xf32> to vector<4x16x16xf32>
    %62 = vector.broadcast %41 : vector<1x16x8xf32> to vector<4x16x8xf32>
    %63 = arith.mulf %59, %62 : vector<4x16x8xf32>
    %64 = vector.broadcast %43 : vector<1x16x8xf32> to vector<4x16x8xf32>
    %65 = arith.mulf %60, %64 : vector<4x16x8xf32>
    %66 = arith.subf %63, %65 : vector<4x16x8xf32>
    %67 = vector.broadcast %41 : vector<1x16x8xf32> to vector<4x16x8xf32>
    %68 = arith.mulf %60, %67 : vector<4x16x8xf32>
    %69 = vector.broadcast %43 : vector<1x16x8xf32> to vector<4x16x8xf32>
    %70 = arith.mulf %59, %69 : vector<4x16x8xf32>
    %71 = arith.addf %68, %70 : vector<4x16x8xf32>
    %72 = tpu.concatenate %66, %71, %61 in 2 : vector<4x16x8xf32>, vector<4x16x8xf32>, vector<4x16x16xf32> -> vector<4x16x32xf32>
    %73 = arith.truncf %72 : vector<4x16x32xf32> to vector<4x16x32xbf16>
    "tpu.trace_start"() <{level = 10 : i32, message = "hqd,hkd->hqk"}> : () -> ()
    %cst_17 = arith.constant dense<0.000000e+00> : vector<4x16x16xf32>
    %74 = tpu.matmul %58, %73, %cst_17 {dimension_numbers = #tpu.dot_dimension_numbers<[2], [2], [1], [1], [0, 0, 0, 1, 1, 1], [0], [0]>} : vector<4x16x32xbf16>, vector<4x16x32xbf16>, vector<4x16x16xf32> -> vector<4x16x16xf32>
    "tpu.trace_stop"() : () -> ()
    %75 = tpu.iota {dimensions = array<i32: 0>} : vector<16x16xi32>
    %76 = tpu.iota {dimensions = array<i32: 1>} : vector<16x16xi32>
    %77 = arith.cmpi sle, %76, %75 : vector<16x16xi32>
    %78 = vector.shape_cast %77 : vector<16x16xi1> to vector<1x16x16xi1>
    %cst_18 = arith.constant -1.000000e+30 : f32
    %79 = vector.shape_cast %78 : vector<1x16x16xi1> to vector<1x16x16xi1>
    %80 = vector.broadcast %79 : vector<1x16x16xi1> to vector<4x16x16xi1>
    %81 = vector.broadcast %cst_18 : f32 to vector<4x16x16xf32>
    %82 = arith.select %80, %74, %81 : vector<4x16x16xi1>, vector<4x16x16xf32>
    %cst_19 = arith.constant dense<0xFF800000> : vector<4x16xf32>
    %83 = vector.multi_reduction <maximumf>, %82, %cst_19 [2] : vector<4x16x16xf32> to vector<4x16xf32>
    %84 = vector.shape_cast %83 : vector<4x16xf32> to vector<4x16x1xf32>
    %85 = vector.broadcast %84 : vector<4x16x1xf32> to vector<4x16x16xf32>
    %86 = arith.subf %82, %85 : vector<4x16x16xf32>
    %87 = math.exp %86 : vector<4x16x16xf32>
    %cst_20 = arith.constant dense<0.000000e+00> : vector<4x16xf32>
    %88 = vector.multi_reduction <add>, %87, %cst_20 [2] : vector<4x16x16xf32> to vector<4x16xf32>
    %89 = vector.shape_cast %88 : vector<4x16xf32> to vector<4x16x1xf32>
    %90 = tpu.reciprocal %89 {approx = true} : vector<4x16x1xf32> -> vector<4x16x1xf32>
    %91 = vector.broadcast %90 : vector<4x16x1xf32> to vector<4x16x16xf32>
    %92 = arith.mulf %87, %91 : vector<4x16x16xf32>
    %93 = arith.truncf %92 : vector<4x16x16xf32> to vector<4x16x16xbf16>
    "tpu.trace_start"() <{level = 10 : i32, message = "hqk,hkd->hqd"}> : () -> ()
    %cst_21 = arith.constant dense<0.000000e+00> : vector<4x16x32xf32>
    %94 = tpu.matmul %93, %39, %cst_21 {dimension_numbers = #tpu.dot_dimension_numbers<[2], [1], [1], [2], [0, 0, 0, 1, 1, 2], [0], [0]>} : vector<4x16x16xbf16>, vector<4x16x32xbf16>, vector<4x16x32xf32> -> vector<4x16x32xf32>
    "tpu.trace_stop"() : () -> ()
    %95 = vector.extract_strided_slice %94 {offsets = [0, 0, 0], sizes = [1, 16, 32], strides = [1, 1, 1]} : vector<4x16x32xf32> to vector<1x16x32xf32>
    %96 = vector.shape_cast %95 : vector<1x16x32xf32> to vector<16x32xf32>
    %97 = vector.extract_strided_slice %94 {offsets = [1, 0, 0], sizes = [1, 16, 32], strides = [1, 1, 1]} : vector<4x16x32xf32> to vector<1x16x32xf32>
    %98 = vector.shape_cast %97 : vector<1x16x32xf32> to vector<16x32xf32>
    %99 = vector.extract_strided_slice %94 {offsets = [2, 0, 0], sizes = [1, 16, 32], strides = [1, 1, 1]} : vector<4x16x32xf32> to vector<1x16x32xf32>
    %100 = vector.shape_cast %99 : vector<1x16x32xf32> to vector<16x32xf32>
    %101 = vector.extract_strided_slice %94 {offsets = [3, 0, 0], sizes = [1, 16, 32], strides = [1, 1, 1]} : vector<4x16x32xf32> to vector<1x16x32xf32>
    %102 = vector.shape_cast %101 : vector<1x16x32xf32> to vector<16x32xf32>
    %103 = tpu.concatenate %96, %98, %100, %102 in 1 : vector<16x32xf32>, vector<16x32xf32>, vector<16x32xf32>, vector<16x32xf32> -> vector<16x128xf32>
    %104 = arith.truncf %103 : vector<16x128xf32> to vector<16x128xbf16>
    %c0_22 = arith.constant 0 : index
    %c0_23 = arith.constant 0 : index
    %105 = vector.load %arg7[%c0_22, %c0_23] : memref<128x128xbf16, #tpu.memory_space<vmem>>, vector<128x128xbf16>
    %cst_24 = arith.constant dense<0.000000e+00> : vector<16x128xf32>
    %106 = tpu.matmul %104, %105, %cst_24 {dimension_numbers = #tpu.dot_dimension_numbers<[1], [0], [0], [1], [0, 0, 1, 1], [], []>} : vector<16x128xbf16>, vector<128x128xbf16>, vector<16x128xf32> -> vector<16x128xf32>
    %107 = arith.addf %0, %106 : vector<16x128xf32>
    %c0_25 = arith.constant 0 : index
    %c0_26 = arith.constant 0 : index
    %108 = vector.load %arg8[%c0_25, %c0_26] : memref<1x128xf32, #tpu.memory_space<vmem>>, vector<1x128xf32>
    %c0_27 = arith.constant 0 : index
    %c0_28 = arith.constant 0 : index
    %109 = vector.load %arg9[%c0_27, %c0_28] : memref<1x128xf32, #tpu.memory_space<vmem>>, vector<1x128xf32>
    %cst_29 = arith.constant dense<0.000000e+00> : vector<16xf32>
    %110 = vector.multi_reduction <add>, %107, %cst_29 [1] : vector<16x128xf32> to vector<16xf32>
    %111 = vector.shape_cast %110 : vector<16xf32> to vector<16x1xf32>
    %cst_30 = arith.constant 1.280000e+02 : f32
    %112 = vector.broadcast %cst_30 : f32 to vector<16x1xf32>
    %113 = arith.divf %111, %112 : vector<16x1xf32>
    %114 = vector.broadcast %113 : vector<16x1xf32> to vector<16x128xf32>
    %115 = arith.subf %107, %114 : vector<16x128xf32>
    %116 = arith.mulf %115, %115 : vector<16x128xf32>
    %cst_31 = arith.constant dense<0.000000e+00> : vector<16xf32>
    %117 = vector.multi_reduction <add>, %116, %cst_31 [1] : vector<16x128xf32> to vector<16xf32>
    %118 = vector.shape_cast %117 : vector<16xf32> to vector<16x1xf32>
    %cst_32 = arith.constant 1.280000e+02 : f32
    %119 = vector.broadcast %cst_32 : f32 to vector<16x1xf32>
    %120 = arith.divf %118, %119 : vector<16x1xf32>
    %121 = vector.broadcast %113 : vector<16x1xf32> to vector<16x128xf32>
    %122 = arith.subf %107, %121 : vector<16x128xf32>
    %cst_33 = arith.constant 9.99999974E-6 : f32
    %123 = vector.broadcast %cst_33 : f32 to vector<16x1xf32>
    %124 = arith.addf %120, %123 : vector<16x1xf32>
    %125 = math.rsqrt %124 : vector<16x1xf32>
    %126 = vector.broadcast %125 : vector<16x1xf32> to vector<16x128xf32>
    %127 = arith.mulf %122, %126 : vector<16x128xf32>
    %128 = vector.broadcast %108 : vector<1x128xf32> to vector<16x128xf32>
    %129 = arith.mulf %127, %128 : vector<16x128xf32>
    %130 = vector.broadcast %109 : vector<1x128xf32> to vector<16x128xf32>
    %131 = arith.addf %129, %130 : vector<16x128xf32>
    %132 = arith.truncf %131 : vector<16x128xf32> to vector<16x128xbf16>
    %c0_34 = arith.constant 0 : index
    %c0_35 = arith.constant 0 : index
    %133 = vector.load %arg10[%c0_34, %c0_35] : memref<128x512xbf16, #tpu.memory_space<vmem>>, vector<128x512xbf16>
    %cst_36 = arith.constant dense<0.000000e+00> : vector<16x512xf32>
    %134 = tpu.matmul %132, %133, %cst_36 {dimension_numbers = #tpu.dot_dimension_numbers<[1], [0], [0], [1], [0, 0, 1, 1], [], []>} : vector<16x128xbf16>, vector<128x512xbf16>, vector<16x512xf32> -> vector<16x512xf32>
    %135 = vector.extract_strided_slice %134 {offsets = [0, 0], sizes = [16, 256], strides = [1, 1]} : vector<16x512xf32> to vector<16x256xf32>
    %136 = vector.extract_strided_slice %134 {offsets = [0, 256], sizes = [16, 256], strides = [1, 1]} : vector<16x512xf32> to vector<16x256xf32>
    %137 = arith.negf %136 : vector<16x256xf32>
    %138 = math.exp %137 : vector<16x256xf32>
    %cst_37 = arith.constant 1.000000e+00 : f32
    %139 = vector.broadcast %cst_37 : f32 to vector<16x256xf32>
    %140 = arith.addf %139, %138 : vector<16x256xf32>
    %141 = arith.divf %139, %140 : vector<16x256xf32>
    %142 = arith.mulf %136, %141 : vector<16x256xf32>
    %143 = arith.mulf %135, %142 : vector<16x256xf32>
    %144 = arith.truncf %143 : vector<16x256xf32> to vector<16x256xbf16>
    %c0_38 = arith.constant 0 : index
    %c0_39 = arith.constant 0 : index
    %145 = vector.load %arg11[%c0_38, %c0_39] : memref<256x128xbf16, #tpu.memory_space<vmem>>, vector<256x128xbf16>
    %cst_40 = arith.constant dense<0.000000e+00> : vector<16x128xf32>
    %146 = tpu.matmul %144, %145, %cst_40 {dimension_numbers = #tpu.dot_dimension_numbers<[1], [0], [0], [1], [0, 0, 1, 1], [], []>} : vector<16x256xbf16>, vector<256x128xbf16>, vector<16x128xf32> -> vector<16x128xf32>
    %147 = arith.addf %107, %146 : vector<16x128xf32>
    %c0_41 = arith.constant 0 : index
    %c0_42 = arith.constant 0 : index
    %148 = vector.load %arg12[%c0_41, %c0_42] : memref<16x128xf32, #tpu.memory_space<vmem>>, vector<16x128xf32>
    tpu.vector_store %arg12[%c0_41, %c0_42], %147 {strides = array<i32>} : memref<16x128xf32, #tpu.memory_space<vmem>>, vector<16x128xf32>,
    return
  }
  func.func @transform_0(%arg0: i32) -> (i32, i32) {
    %c0_i32 = arith.constant 0 : i32
    %c0_i32_0 = arith.constant 0 : i32
    return %arg0, %c0_i32 : i32, i32
  }
  func.func @transform_1(%arg0: i32) -> (i32, i32) {
    %c0_i32 = arith.constant 0 : i32
    %c0_i32_0 = arith.constant 0 : i32
    return %arg0, %c0_i32 : i32, i32
  }
  func.func @transform_2(%arg0: i32) -> (i32, i32) {
    %c0_i32 = arith.constant 0 : i32
    %c0_i32_0 = arith.constant 0 : i32
    return %arg0, %c0_i32 : i32, i32
  }
  func.func @transform_3(%arg0: i32) -> (i32, i32) {
    %c0_i32 = arith.constant 0 : i32
    %c0_i32_0 = arith.constant 0 : i32
    %c0_i32_1 = arith.constant 0 : i32
    return %c0_i32, %c0_i32_0 : i32, i32
  }
  func.func @transform_4(%arg0: i32) -> (i32, i32) {
    %c0_i32 = arith.constant 0 : i32
    %c0_i32_0 = arith.constant 0 : i32
    %c0_i32_1 = arith.constant 0 : i32
    return %c0_i32, %c0_i32_0 : i32, i32
  }
  func.func @transform_5(%arg0: i32) -> (i32, i32) {
    %c0_i32 = arith.constant 0 : i32
    %c0_i32_0 = arith.constant 0 : i32
    %c0_i32_1 = arith.constant 0 : i32
    return %c0_i32, %c0_i32_0 : i32, i32
  }
  func.func @transform_6(%arg0: i32) -> (i32, i32) {
    %c0_i32 = arith.constant 0 : i32
    %c0_i32_0 = arith.constant 0 : i32
    %c0_i32_1 = arith.constant 0 : i32
    return %c0_i32, %c0_i32_0 : i32, i32
  }
  func.func @transform_7(%arg0: i32) -> (i32, i32) {
    %c0_i32 = arith.constant 0 : i32
    %c0_i32_0 = arith.constant 0 : i32
    %c0_i32_1 = arith.constant 0 : i32
    return %c0_i32, %c0_i32_0 : i32, i32
  }
  func.func @transform_8(%arg0: i32) -> (i32, i32) {
    %c0_i32 = arith.constant 0 : i32
    %c0_i32_0 = arith.constant 0 : i32
    %c0_i32_1 = arith.constant 0 : i32
    return %c0_i32, %c0_i32_0 : i32, i32
  }
  func.func @transform_9(%arg0: i32) -> (i32, i32) {
    %c0_i32 = arith.constant 0 : i32
    %c0_i32_0 = arith.constant 0 : i32
    %c0_i32_1 = arith.constant 0 : i32
    return %c0_i32, %c0_i32_0 : i32, i32
  }
  func.func @transform_10(%arg0: i32) -> (i32, i32) {
    %c0_i32 = arith.constant 0 : i32
    %c0_i32_0 = arith.constant 0 : i32
    %c0_i32_1 = arith.constant 0 : i32
    return %c0_i32, %c0_i32_0 : i32, i32
  }
  func.func @transform_11(%arg0: i32) -> (i32, i32) {
    %c0_i32 = arith.constant 0 : i32
    %c0_i32_0 = arith.constant 0 : i32
    return %arg0, %c0_i32 : i32, i32
  }
}

</mosaic_0001>

<llo_original>
// kernel: tpu_custom_call.1
$region0: #{tpu_custom_call.1}
  #allocation0 [shape = 'u32[]', space=smem, size = 0x4, offset = 0x4, fixed_abs, tag = 'smem constant byte address 0x4 - core index']
  #allocation1 [shape = 'u32[144,128]{1,0:T(1,128)}', space=vmem, size = 0x12000, scoped, tag = 'internal scratch']
  %s0 = inlined_call_operand.vmem [shape: f32[32,128], index: 0, kind: input, shape index: {}]
  %s1 = inlined_call_operand.vmem [shape: f32[32,8], index: 1, kind: input, shape index: {}]
  %s2 = inlined_call_operand.vmem [shape: f32[32,8], index: 2, kind: input, shape index: {}]
  %s3 = inlined_call_operand.vmem [shape: f32[1,128], index: 3, kind: input, shape index: {}]
  %s4 = inlined_call_operand.vmem [shape: f32[1,128], index: 4, kind: input, shape index: {}]
  %s5 = inlined_call_operand.hbm [shape: bf16[128,384], index: 5, kind: input, shape index: {}]
  %s6 = inlined_call_operand.vmem [shape: bf16[128,128], index: 6, kind: input, shape index: {}]
  %s7 = inlined_call_operand.vmem [shape: f32[1,128], index: 7, kind: input, shape index: {}]
  %s8 = inlined_call_operand.vmem [shape: f32[1,128], index: 8, kind: input, shape index: {}]
  %s9 = inlined_call_operand.hbm [shape: bf16[128,512], index: 9, kind: input, shape index: {}]
  %s10 = inlined_call_operand.hbm [shape: bf16[256,128], index: 10, kind: input, shape index: {}]
  %s11 = inlined_call_operand.hbm [shape: f32[32,128], index: 11, kind: output, shape index: {}]
  %s12 = sld [smem:[#allocation0]]
  $region89: #{tpu_custom_call.1} parent=0
    _
  %s14 = ssub.s32 1, %s12
  %s15 = scalar_select 0, %s14, %s12
  $region1: #{tpu_custom_call.1} parent=0
    #allocation2 [shape = 'u8[98304]{0}', space=vmem, size = 0x18000, scoped, tag = 'input window, operand 5, single buffered']
    #allocation3 [shape = 's32[2]{0}', space=sflag, size = 0x8, scoped, tag = 'scoped memory for tpu_custom_call.1']
    #allocation4 [shape = 's32[2]{0}', space=sflag, size = 0x8, scoped, tag = 'scoped memory for tpu_custom_call.1']
    #allocation5 [shape = 'u8[131072]{0}', space=vmem, size = 0x20000, scoped, tag = 'input window, operand 9, single buffered']
    #allocation6 [shape = 's32[1]{0}', space=sflag, size = 0x4, scoped, tag = 'scoped memory for tpu_custom_call.1']
    #allocation7 [shape = 'u8[65536]{0}', space=vmem, size = 0x10000, scoped, tag = 'input window, operand 10, single buffered']
    #allocation8 [shape = 'u8[16384]{0}', space=vmem, size = 0x4000, scoped, tag = 'output window, operand 0']
    %16 = vsyncpa [#allocation3], 0
    %17 = vsyncpa [#allocation6], 0
    %18 = vsyncpa [#allocation4], 0
    %s19 = scalar_lea.sflag [#allocation4], 1
    %20 = vsyncpa %s19, 0
    loop: start=0, step=1, limit=4
    $region2: #{tpu_custom_call.1} parent=1 // loop_pre_header
      _
    $region3: #{tpu_custom_call.1} parent=1 // loop_header
      %s22 = sphi 0, %s26
      %p23 = scmp.ge.s32.totalorder %s22, 4
      %s32 = sphi 0, %s34
      %s35 = sphi 0, %s32
      %s36 = sphi 0, %s35
      %s52 = sphi 0, %s36
      %s58 = sphi 0, %s60
      %s61 = sphi 0, %s58
      %s62 = sphi 0, %s61
      %s78 = sphi 0, %s62
      %s84 = sphi 0, %s86
      %s87 = sphi 0, %s84
      %s88 = sphi 0, %s87
      %s104 = sphi 0, %s88
      %s108 = sphi 0, %s108
      %s110 = sphi 0, %s108
      %s111 = sphi 0, %s110
      %s125 = sphi 0, %s111
      %s129 = sphi 0, %s129
      %s131 = sphi 0, %s129
      %s132 = sphi 0, %s131
      %s146 = sphi 0, %s132
      %s150 = sphi 0, %s150
      %s152 = sphi 0, %s150
      %s153 = sphi 0, %s152
      %s167 = sphi 0, %s153
      %s171 = sphi 0, %s171
      %s173 = sphi 0, %s171
      %s174 = sphi 0, %s173
      %s188 = sphi 0, %s174
      %s192 = sphi 0, %s192
      %s194 = sphi 0, %s192
      %s195 = sphi 0, %s194
      %s209 = sphi 0, %s195
      %s213 = sphi 0, %s213
      %s215 = sphi 0, %s213
      %s216 = sphi 0, %s215
      %s230 = sphi 0, %s216
      %s234 = sphi 0, %s234
      %s236 = sphi 0, %s234
      %s237 = sphi 0, %s236
      %s251 = sphi 0, %s237
      %s255 = sphi 0, %s255
      %s257 = sphi 0, %s255
      %s258 = sphi 0, %s257
      %s272 = sphi 0, %s258
      %s278 = sphi 0, %s280
      %s281 = sphi 0, %s278
      %s282 = sphi 0, %s281
      %s298 = sphi 0, %s282
    $region4: #{tpu_custom_call.1} parent=1 // loop_header_branch
      %25 = sbr.rel (%p23) target = $region8
    $region5: #{tpu_custom_call.1} parent=1 // loop_body
      %s27 = ssub.s32 %s22, 1
      %s28 = ssub.s32 %s22, 2
      %s29 = sadd.s32 %s22, 1
      %s30 = ssub.s32 %s22, %s29
      %p31 = scmp.eq.s32.totalorder %s30, 0
      %s33 = sadd.s32 %s32, 1
      %s34 = scalar_select %p31, %s32, %s33
      %p37 = pneg %p31
      %p38 = scmp.eq.s32.totalorder %s22, 1
      %p39 = por %p37, %p38
      %p40 = scmp.ne.s32.totalorder %s32, %s35
      %p41 = scmp.eq.s32.totalorder %s22, 0
      %p42 = por %p40, %p41
      %p43 = scmp.ne.s32.totalorder %s32, %s35
      %p44 = scmp.eq.s32.totalorder %s27, 1
      %p45 = por %p43, %p44
      %p46 = scmp.ne.s32.totalorder %s35, %s36
      %p47 = scmp.eq.s32.totalorder %s27, 0
      %p48 = por %p46, %p47
      %p49 = scmp.ne.s32.totalorder %s35, %s36
      %p50 = scmp.eq.s32.totalorder %s28, 1
      %p51 = por %p49, %p50
      %p53 = scmp.ne.s32.totalorder %s36, %s52
      %p54 = scmp.eq.s32.totalorder %s28, 0
      %p55 = por %p53, %p54
      %s56 = ssub.s32 %s22, %s29
      %p57 = scmp.eq.s32.totalorder %s56, 0
      %s59 = sadd.s32 %s58, 1
      %s60 = scalar_select %p57, %s58, %s59
      %p63 = pneg %p57
      %p64 = scmp.eq.s32.totalorder %s22, 1
      %p65 = por %p63, %p64
      %p66 = scmp.ne.s32.totalorder %s58, %s61
      %p67 = scmp.eq.s32.totalorder %s22, 0
      %p68 = por %p66, %p67
      %p69 = scmp.ne.s32.totalorder %s58, %s61
      %p70 = scmp.eq.s32.totalorder %s27, 1
      %p71 = por %p69, %p70
      %p72 = scmp.ne.s32.totalorder %s61, %s62
      %p73 = scmp.eq.s32.totalorder %s27, 0
      %p74 = por %p72, %p73
      %p75 = scmp.ne.s32.totalorder %s61, %s62
      %p76 = scmp.eq.s32.totalorder %s28, 1
      %p77 = por %p75, %p76
      %p79 = scmp.ne.s32.totalorder %s62, %s78
      %p80 = scmp.eq.s32.totalorder %s28, 0
      %p81 = por %p79, %p80
      %s82 = ssub.s32 %s22, %s29
      %p83 = scmp.eq.s32.totalorder %s82, 0
      %s85 = sadd.s32 %s84, 1
      %s86 = scalar_select %p83, %s84, %s85
      %p89 = pneg %p83
      %p90 = scmp.eq.s32.totalorder %s22, 1
      %p91 = por %p89, %p90
      %p92 = scmp.ne.s32.totalorder %s84, %s87
      %p93 = scmp.eq.s32.totalorder %s22, 0
      %p94 = por %p92, %p93
      %p95 = scmp.ne.s32.totalorder %s84, %s87
      %p96 = scmp.eq.s32.totalorder %s27, 1
      %p97 = por %p95, %p96
      %p98 = scmp.ne.s32.totalorder %s87, %s88
      %p99 = scmp.eq.s32.totalorder %s27, 0
      %p100 = por %p98, %p99
      %p101 = scmp.ne.s32.totalorder %s87, %s88
      %p102 = scmp.eq.s32.totalorder %s28, 1
      %p103 = por %p101, %p102
      %p105 = scmp.ne.s32.totalorder %s88, %s104
      %p106 = scmp.eq.s32.totalorder %s28, 0
      %p107 = por %p105, %p106
      %s109 = sadd.s32 %s108, 1
      %p112 = scmp.eq.s32.totalorder %s22, 1
      %p113 = scmp.ne.s32.totalorder %s108, %s110
      %p114 = scmp.eq.s32.totalorder %s22, 0
      %p115 = por %p113, %p114
      %p116 = scmp.ne.s32.totalorder %s108, %s110
      %p117 = scmp.eq.s32.totalorder %s27, 1
      %p118 = por %p116, %p117
      %p119 = scmp.ne.s32.totalorder %s110, %s111
      %p120 = scmp.eq.s32.totalorder %s27, 0
      %p121 = por %p119, %p120
      %p122 = scmp.ne.s32.totalorder %s110, %s111
      %p123 = scmp.eq.s32.totalorder %s28, 1
      %p124 = por %p122, %p123
      %p126 = scmp.ne.s32.totalorder %s111, %s125
      %p127 = scmp.eq.s32.totalorder %s28, 0
      %p128 = por %p126, %p127
      %s130 = sadd.s32 %s129, 1
      %p133 = scmp.eq.s32.totalorder %s22, 1
      %p134 = scmp.ne.s32.totalorder %s129, %s131
      %p135 = scmp.eq.s32.totalorder %s22, 0
      %p136 = por %p134, %p135
      %p137 = scmp.ne.s32.totalorder %s129, %s131
      %p138 = scmp.eq.s32.totalorder %s27, 1
      %p139 = por %p137, %p138
      %p140 = scmp.ne.s32.totalorder %s131, %s132
      %p141 = scmp.eq.s32.totalorder %s27, 0
      %p142 = por %p140, %p141
      %p143 = scmp.ne.s32.totalorder %s131, %s132
      %p144 = scmp.eq.s32.totalorder %s28, 1
      %p145 = por %p143, %p144
      %p147 = scmp.ne.s32.totalorder %s132, %s146
      %p148 = scmp.eq.s32.totalorder %s28, 0
      %p149 = por %p147, %p148
      %s151 = sadd.s32 %s150, 1
      %p154 = scmp.eq.s32.totalorder %s22, 1
      %p155 = scmp.ne.s32.totalorder %s150, %s152
      %p156 = scmp.eq.s32.totalorder %s22, 0
      %p157 = por %p155, %p156
      %p158 = scmp.ne.s32.totalorder %s150, %s152
      %p159 = scmp.eq.s32.totalorder %s27, 1
      %p160 = por %p158, %p159
      %p161 = scmp.ne.s32.totalorder %s152, %s153
      %p162 = scmp.eq.s32.totalorder %s27, 0
      %p163 = por %p161, %p162
      %p164 = scmp.ne.s32.totalorder %s152, %s153
      %p165 = scmp.eq.s32.totalorder %s28, 1
      %p166 = por %p164, %p165
      %p168 = scmp.ne.s32.totalorder %s153, %s167
      %p169 = scmp.eq.s32.totalorder %s28, 0
      %p170 = por %p168, %p169
      %s172 = sadd.s32 %s171, 1
      %p175 = scmp.eq.s32.totalorder %s22, 1
      %p176 = scmp.ne.s32.totalorder %s171, %s173
      %p177 = scmp.eq.s32.totalorder %s22, 0
      %p178 = por %p176, %p177
      %p179 = scmp.ne.s32.totalorder %s171, %s173
      %p180 = scmp.eq.s32.totalorder %s27, 1
      %p181 = por %p179, %p180
      %p182 = scmp.ne.s32.totalorder %s173, %s174
      %p183 = scmp.eq.s32.totalorder %s27, 0
      %p184 = por %p182, %p183
      %p185 = scmp.ne.s32.totalorder %s173, %s174
      %p186 = scmp.eq.s32.totalorder %s28, 1
      %p187 = por %p185, %p186
      %p189 = scmp.ne.s32.totalorder %s174, %s188
      %p190 = scmp.eq.s32.totalorder %s28, 0
      %p191 = por %p189, %p190
      %s193 = sadd.s32 %s192, 1
      %p196 = scmp.eq.s32.totalorder %s22, 1
      %p197 = scmp.ne.s32.totalorder %s192, %s194
      %p198 = scmp.eq.s32.totalorder %s22, 0
      %p199 = por %p197, %p198
      %p200 = scmp.ne.s32.totalorder %s192, %s194
      %p201 = scmp.eq.s32.totalorder %s27, 1
      %p202 = por %p200, %p201
      %p203 = scmp.ne.s32.totalorder %s194, %s195
      %p204 = scmp.eq.s32.totalorder %s27, 0
      %p205 = por %p203, %p204
      %p206 = scmp.ne.s32.totalorder %s194, %s195
      %p207 = scmp.eq.s32.totalorder %s28, 1
      %p208 = por %p206, %p207
      %p210 = scmp.ne.s32.totalorder %s195, %s209
      %p211 = scmp.eq.s32.totalorder %s28, 0
      %p212 = por %p210, %p211
      %s214 = sadd.s32 %s213, 1
      %p217 = scmp.eq.s32.totalorder %s22, 1
      %p218 = scmp.ne.s32.totalorder %s213, %s215
      %p219 = scmp.eq.s32.totalorder %s22, 0
      %p220 = por %p218, %p219
      %p221 = scmp.ne.s32.totalorder %s213, %s215
      %p222 = scmp.eq.s32.totalorder %s27, 1
      %p223 = por %p221, %p222
      %p224 = scmp.ne.s32.totalorder %s215, %s216
      %p225 = scmp.eq.s32.totalorder %s27, 0
      %p226 = por %p224, %p225
      %p227 = scmp.ne.s32.totalorder %s215, %s216
      %p228 = scmp.eq.s32.totalorder %s28, 1
      %p229 = por %p227, %p228
      %p231 = scmp.ne.s32.totalorder %s216, %s230
      %p232 = scmp.eq.s32.totalorder %s28, 0
      %p233 = por %p231, %p232
      %s235 = sadd.s32 %s234, 1
      %p238 = scmp.eq.s32.totalorder %s22, 1
      %p239 = scmp.ne.s32.totalorder %s234, %s236
      %p240 = scmp.eq.s32.totalorder %s22, 0
      %p241 = por %p239, %p240
      %p242 = scmp.ne.s32.totalorder %s234, %s236
      %p243 = scmp.eq.s32.totalorder %s27, 1
      %p244 = por %p242, %p243
      %p245 = scmp.ne.s32.totalorder %s236, %s237
      %p246 = scmp.eq.s32.totalorder %s27, 0
      %p247 = por %p245, %p246
      %p248 = scmp.ne.s32.totalorder %s236, %s237
      %p249 = scmp.eq.s32.totalorder %s28, 1
      %p250 = por %p248, %p249
      %p252 = scmp.ne.s32.totalorder %s237, %s251
      %p253 = scmp.eq.s32.totalorder %s28, 0
      %p254 = por %p252, %p253
      %s256 = sadd.s32 %s255, 1
      %p259 = scmp.eq.s32.totalorder %s22, 1
      %p260 = scmp.ne.s32.totalorder %s255, %s257
      %p261 = scmp.eq.s32.totalorder %s22, 0
      %p262 = por %p260, %p261
      %p263 = scmp.ne.s32.totalorder %s255, %s257
      %p264 = scmp.eq.s32.totalorder %s27, 1
      %p265 = por %p263, %p264
      %p266 = scmp.ne.s32.totalorder %s257, %s258
      %p267 = scmp.eq.s32.totalorder %s27, 0
      %p268 = por %p266, %p267
      %p269 = scmp.ne.s32.totalorder %s257, %s258
      %p270 = scmp.eq.s32.totalorder %s28, 1
      %p271 = por %p269, %p270
      %p273 = scmp.ne.s32.totalorder %s258, %s272
      %p274 = scmp.eq.s32.totalorder %s28, 0
      %p275 = por %p273, %p274
      %s276 = ssub.s32 %s22, %s29
      %p277 = scmp.eq.s32.totalorder %s276, 0
      %s279 = sadd.s32 %s278, 1
      %s280 = scalar_select %p277, %s278, %s279
      %p283 = pneg %p277
      %p284 = scmp.eq.s32.totalorder %s22, 1
      %p285 = por %p283, %p284
      %p286 = scmp.ne.s32.totalorder %s278, %s281
      %p287 = scmp.eq.s32.totalorder %s22, 0
      %p288 = por %p286, %p287
      %p289 = scmp.ne.s32.totalorder %s278, %s281
      %p290 = scmp.eq.s32.totalorder %s27, 1
      %p291 = por %p289, %p290
      %p292 = scmp.ne.s32.totalorder %s281, %s282
      %p293 = scmp.eq.s32.totalorder %s27, 0
      %p294 = por %p292, %p293
      %p295 = scmp.ne.s32.totalorder %s281, %s282
      %p296 = scmp.eq.s32.totalorder %s28, 1
      %p297 = por %p295, %p296
      %p299 = scmp.ne.s32.totalorder %s282, %s298
      %p300 = scmp.eq.s32.totalorder %s28, 0
      %p301 = por %p299, %p300
      %p302 = scmp.le.s32.totalorder 1, %s22
      %p303 = scmp.lt.s32.totalorder %s22, 3
      %p304 = pnand %p302, %p303
      %p305 = pneg %p304
      // Predicated region
      $region9: #{tpu_custom_call.1} parent=5 // pred_check
        _
      $region10: #{tpu_custom_call.1} parent=5 // pred_check_branch
        %307 = sbr.rel (%p304) target = $region12
      $region11: #{tpu_custom_call.1} parent=5 // pred_region
        %s308 = ssub.s32 %s22, 1
        // Predicated region
        $region13: #{tpu_custom_call.1} parent=11 // pred_check
          %p309 = pneg %p121
        $region14: #{tpu_custom_call.1} parent=11 // pred_check_branch
          %311 = sbr.rel (%p309) target = $region16
        $region15: #{tpu_custom_call.1} parent=11 // pred_region
          _
        $region16: #{tpu_custom_call.1} parent=11 // pred_fallthru
          _
        // Predicated region
        $region17: #{tpu_custom_call.1} parent=11 // pred_check
          %p312 = pneg %p142
        $region18: #{tpu_custom_call.1} parent=11 // pred_check_branch
          %314 = sbr.rel (%p312) target = $region20
        $region19: #{tpu_custom_call.1} parent=11 // pred_region
          _
        $region20: #{tpu_custom_call.1} parent=11 // pred_fallthru
          _
        // Predicated region
        $region21: #{tpu_custom_call.1} parent=11 // pred_check
          %p315 = pneg %p163
        $region22: #{tpu_custom_call.1} parent=11 // pred_check_branch
          %317 = sbr.rel (%p315) target = $region24
        $region23: #{tpu_custom_call.1} parent=11 // pred_region
          %s319 = ssub.s32 3072, 3072
          %320 = vsyncadd [#allocation3], %s319
          %s321 = sshll.u32 [#allocation2], 4
          %s322 = int_to_ptr.vmem [resolvable:$true] %s321
          %327 = dma.hbm_to_vmem [thread:$0]  %s5, 3072, %s322, [#allocation3], 192, 192, 12
        $region24: #{tpu_custom_call.1} parent=11 // pred_fallthru
          _
        // Predicated region
        $region25: #{tpu_custom_call.1} parent=11 // pred_check
          %p328 = pneg %p184
        $region26: #{tpu_custom_call.1} parent=11 // pred_check_branch
          %330 = sbr.rel (%p328) target = $region28
        $region27: #{tpu_custom_call.1} parent=11 // pred_region
          _
        $region28: #{tpu_custom_call.1} parent=11 // pred_fallthru
          _
        // Predicated region
        $region29: #{tpu_custom_call.1} parent=11 // pred_check
          %p331 = pneg %p205
        $region30: #{tpu_custom_call.1} parent=11 // pred_check_branch
          %333 = sbr.rel (%p331) target = $region32
        $region31: #{tpu_custom_call.1} parent=11 // pred_region
          _
        $region32: #{tpu_custom_call.1} parent=11 // pred_fallthru
          _
        // Predicated region
        $region33: #{tpu_custom_call.1} parent=11 // pred_check
          %p334 = pneg %p226
        $region34: #{tpu_custom_call.1} parent=11 // pred_check_branch
          %336 = sbr.rel (%p334) target = $region36
        $region35: #{tpu_custom_call.1} parent=11 // pred_region
          _
        $region36: #{tpu_custom_call.1} parent=11 // pred_fallthru
          _
        // Predicated region
        $region37: #{tpu_custom_call.1} parent=11 // pred_check
          %p337 = pneg %p247
        $region38: #{tpu_custom_call.1} parent=11 // pred_check_branch
          %339 = sbr.rel (%p337) target = $region40
        $region39: #{tpu_custom_call.1} parent=11 // pred_region
          %s341 = ssub.s32 4096, 4096
          %342 = vsyncadd [#allocation6], %s341
          %s343 = sshll.u32 [#allocation5], 4
          %s344 = int_to_ptr.vmem [resolvable:$true] %s343
          %349 = dma.hbm_to_vmem [thread:$0]  %s9, 4096, %s344, [#allocation6], 256, 256, 16
        $region40: #{tpu_custom_call.1} parent=11 // pred_fallthru
          _
        // Predicated region
        $region41: #{tpu_custom_call.1} parent=11 // pred_check
          %p350 = pneg %p268
        $region42: #{tpu_custom_call.1} parent=11 // pred_check_branch
          %352 = sbr.rel (%p350) target = $region44
        $region43: #{tpu_custom_call.1} parent=11 // pred_region
          %s354 = ssub.s32 2048, 2048
          %355 = vsyncadd [#allocation6], %s354
          %s356 = sshll.u32 [#allocation7], 4
          %s357 = int_to_ptr.vmem [resolvable:$true] %s356
          %362 = dma.hbm_to_vmem [thread:$0]  %s10, 2048, %s357, [#allocation6], 64, 64, 4
        $region44: #{tpu_custom_call.1} parent=11 // pred_fallthru
          _
      $region12: #{tpu_custom_call.1} parent=5 // pred_fallthru
        _
      %p363 = scmp.lt.s32.totalorder %s22, 2
      // Predicated region
      $region45: #{tpu_custom_call.1} parent=5 // pred_check
        %p364 = pneg %p363
      $region46: #{tpu_custom_call.1} parent=5 // pred_check_branch
        %366 = sbr.rel (%p364) target = $region48
      $region47: #{tpu_custom_call.1} parent=5 // pred_region
        // Predicated region
        $region49: #{tpu_custom_call.1} parent=47 // pred_check
          %p367 = pneg %p42
        $region50: #{tpu_custom_call.1} parent=47 // pred_check_branch
          %369 = sbr.rel (%p367) target = $region52
        $region51: #{tpu_custom_call.1} parent=47 // pred_region
          %s370 = smul.u32 2, %s22
          %p371 = scmp.lt.s32.totalorder %s370, 3
          %s372 = scalar_select %p371, %s370, 3
          %s373 = smul.addr %s372, 8
          %s374 = scalar_lea.vmem %s0, %s373
          %s375 = smul.u32 2, %s22
        $region52: #{tpu_custom_call.1} parent=47 // pred_fallthru
          _
        // Predicated region
        $region53: #{tpu_custom_call.1} parent=47 // pred_check
          %p376 = pneg %p68
        $region54: #{tpu_custom_call.1} parent=47 // pred_check_branch
          %378 = sbr.rel (%p376) target = $region56
        $region55: #{tpu_custom_call.1} parent=47 // pred_region
          %s379 = smul.u32 2, %s22
          %p380 = scmp.lt.s32.totalorder %s379, 3
          %s381 = scalar_select %p380, %s379, 3
          %s382 = smul.addr %s381, 8
          %s383 = scalar_lea.vmem %s1, %s382
          %s384 = smul.u32 2, %s22
        $region56: #{tpu_custom_call.1} parent=47 // pred_fallthru
          _
        // Predicated region
        $region57: #{tpu_custom_call.1} parent=47 // pred_check
          %p385 = pneg %p94
        $region58: #{tpu_custom_call.1} parent=47 // pred_check_branch
          %387 = sbr.rel (%p385) target = $region60
        $region59: #{tpu_custom_call.1} parent=47 // pred_region
          %s388 = smul.u32 2, %s22
          %p389 = scmp.lt.s32.totalorder %s388, 3
          %s390 = scalar_select %p389, %s388, 3
          %s391 = smul.addr %s390, 8
          %s392 = scalar_lea.vmem %s2, %s391
          %s393 = smul.u32 2, %s22
        $region60: #{tpu_custom_call.1} parent=47 // pred_fallthru
          _
      $region48: #{tpu_custom_call.1} parent=5 // pred_fallthru
        _
      %p394 = scmp.le.s32.totalorder 1, %s22
      %p395 = scmp.lt.s32.totalorder %s22, 3
      %p396 = pnand %p394, %p395
      %p397 = pneg %p396
      // Predicated region
      $region61: #{tpu_custom_call.1} parent=5 // pred_check
        _
      $region62: #{tpu_custom_call.1} parent=5 // pred_check_branch
        %399 = sbr.rel (%p396) target = $region64
      $region63: #{tpu_custom_call.1} parent=5 // pred_region
        %s400 = ssub.s32 %s22, 1
        // Predicated region
        $region65: #{tpu_custom_call.1} parent=63 // pred_check
          %p401 = pneg %p163
        $region66: #{tpu_custom_call.1} parent=63 // pred_check_branch
          %403 = sbr.rel (%p401) target = $region68
        $region67: #{tpu_custom_call.1} parent=63 // pred_region
          %404 = dma.done [#allocation3], 3072
        $region68: #{tpu_custom_call.1} parent=63 // pred_fallthru
          _
        // Predicated region
        $region69: #{tpu_custom_call.1} parent=63 // pred_check
          %p405 = pneg %p247
        $region70: #{tpu_custom_call.1} parent=63 // pred_check_branch
          %407 = sbr.rel (%p405) target = $region72
        $region71: #{tpu_custom_call.1} parent=63 // pred_region
          %408 = dma.done [#allocation6], 4096
        $region72: #{tpu_custom_call.1} parent=63 // pred_fallthru
          _
        // Predicated region
        $region73: #{tpu_custom_call.1} parent=63 // pred_check
          %p409 = pneg %p268
        $region74: #{tpu_custom_call.1} parent=63 // pred_check_branch
          %411 = sbr.rel (%p409) target = $region76
        $region75: #{tpu_custom_call.1} parent=63 // pred_region
          %412 = dma.done [#allocation6], 2048
        $region76: #{tpu_custom_call.1} parent=63 // pred_fallthru
          _
        %s413 = smul.u32 2, %s27
        %p414 = scmp.lt.s32.totalorder %s413, 3
        %s415 = scalar_select %p414, %s413, 3
        %s416 = smul.addr %s415, 8
        %s417 = scalar_lea.vmem %s0, %s416
        %p418 = pneg %p48
        %p419 = pneg %p45
        %s420 = smul.u32 2, %s27
        %p421 = scmp.lt.s32.totalorder %s420, 3
        %s422 = scalar_select %p421, %s420, 3
        %s423 = smul.addr %s422, 8
        %s424 = scalar_lea.vmem %s1, %s423
        %p425 = pneg %p74
        %p426 = pneg %p71
        %s427 = smul.u32 2, %s27
        %p428 = scmp.lt.s32.totalorder %s427, 3
        %s429 = scalar_select %p428, %s427, 3
        %s430 = smul.addr %s429, 8
        %s431 = scalar_lea.vmem %s2, %s430
        %p432 = pneg %p100
        %p433 = pneg %p97
        %p434 = pneg %p121
        %p435 = pneg %p118
        %p436 = pneg %p142
        %p437 = pneg %p139
        %p438 = pneg %p163
        %p439 = pneg %p160
        %p440 = pneg %p184
        %p441 = pneg %p181
        %p442 = pneg %p205
        %p443 = pneg %p202
        %p444 = pneg %p226
        %p445 = pneg %p223
        %p446 = pneg %p247
        %p447 = pneg %p244
        %p448 = pneg %p268
        %p449 = pneg %p265
        %p450 = pneg %p294
        %p451 = pneg %p291
        %s452 = sand.u32 %s281, 1
        %s453 = scalar_lea.sflag [#allocation4], %s452
        %s454 = sand.u32 %s281, 1
        %s455 = smul.addr %s454, 16
        %s456 = scalar_lea.vmem [#allocation8], %s455
        %s457 = smul.u32 2, %s27
        %p458 = scmp.lt.s32.totalorder %s457, 3
        %s459 = scalar_select %p458, %s457, 3
        %s460 = smul.addr %s459, 8
        %s461 = scalar_lea.vmem %s0, %s460
        %s462 = smul.u32 2, %s27
        %s463 = smul.u32 2, %s27
        %p464 = scmp.lt.s32.totalorder %s463, 3
        %s465 = scalar_select %p464, %s463, 3
        %s466 = smul.addr %s465, 8
        %s467 = scalar_lea.vmem %s1, %s466
        %s468 = smul.u32 2, %s27
        %s469 = smul.u32 2, %s27
        %p470 = scmp.lt.s32.totalorder %s469, 3
        %s471 = scalar_select %p470, %s469, 3
        %s472 = smul.addr %s471, 8
        %s473 = scalar_lea.vmem %s2, %s472
        %s474 = smul.u32 2, %s27
        %s475 = smul.u32 2, %s27
        %v477 = vld [vmem:[%s461] sm:$0xff]
        %v478 = vld [vmem:[%s461 + $0x8] sm:$0xff]
        %v479 = vld [vmem:[%s3] sm:$0x1]
        %v480 = vld [vmem:[%s4] sm:$0x1]
        %481 = vadd.xlane.f32.xlu0 %v477
        %v482 = vpop.xlane.xlu0 %481
        %483 = vadd.xlane.f32.xlu0 %v478
        %v484 = vpop.xlane.xlu0 %483
        %v485 = vrcp.pop 128.0
        %v486 = vmul.f32 %v482, %v485
        %v487 = vmul.f32 %v484, %v485
        %v488 = vsub.f32 %v477, %v486
        %v489 = vsub.f32 %v478, %v487
        %v490 = vmul.f32 %v488, %v488
        %v491 = vmul.f32 %v489, %v489
        %492 = vadd.xlane.f32.xlu0 %v490
        %v493 = vpop.xlane.xlu0 %492
        %494 = vadd.xlane.f32.xlu0 %v491
        %v495 = vpop.xlane.xlu0 %494
        %v496 = vmul.f32 %v493, %v485
        %v497 = vmul.f32 %v495, %v485
        %v498 = vadd.f32 %v496, 1e-05
        %v499 = vadd.f32 %v497, 1e-05
        %v500 = vrsqrt.pop %v498
        %v501 = vrsqrt.pop %v499
        %v502 = vmul.f32 %v488, %v500
        %v503 = vmul.f32 %v489, %v501
        %v505 = vlaneseq
        %v506 = vshrl.u32 %v505, 7
        %v507 = vsub.s32 0, %v506
        %v508 = vrot.slane %v479, %v507
        %v510 = vmul.f32 %v502, %v508
        %v511 = vmul.f32 %v503, %v508
        %v513 = vlaneseq
        %v514 = vshrl.u32 %v513, 7
        %v515 = vsub.s32 0, %v514
        %v516 = vrot.slane %v480, %v515
        %v518 = vadd.f32 %v510, %v516
        %v519 = vadd.f32 %v511, %v516
        %v520 = vpack.c.bf16 %v519, %v518
        %v521 = vld [vmem:[#allocation2] sm:$0xff]
        %v522 = vld [vmem:[#allocation2 + $0x8] sm:$0xf]
        %v523 = vld [vmem:[#allocation2 + $0xc] sm:$0xff]
        %v524 = vld [vmem:[#allocation2 + $0x14] sm:$0xf]
        %v525 = vld [vmem:[#allocation2 + $0x18] sm:$0xff]
        %v526 = vld [vmem:[#allocation2 + $0x20] sm:$0xf]
        %v527 = vld [vmem:[#allocation2 + $0x24] sm:$0xff]
        %v528 = vld [vmem:[#allocation2 + $0x2c] sm:$0xf]
        %v529 = vld [vmem:[#allocation2 + $0x30] sm:$0xff]
        %v530 = vld [vmem:[#allocation2 + $0x38] sm:$0xf]
        %v531 = vld [vmem:[#allocation2 + $0x3c] sm:$0xff]
        %v532 = vld [vmem:[#allocation2 + $0x44] sm:$0xf]
        %v533 = vld [vmem:[#allocation2 + $0x48] sm:$0xff]
        %v534 = vld [vmem:[#allocation2 + $0x50] sm:$0xf]
        %v535 = vld [vmem:[#allocation2 + $0x54] sm:$0xff]
        %v536 = vld [vmem:[#allocation2 + $0x5c] sm:$0xf]
        %v537 = vld [vmem:[#allocation2 + $0x60] sm:$0xff]
        %v538 = vld [vmem:[#allocation2 + $0x68] sm:$0xf]
        %v539 = vld [vmem:[#allocation2 + $0x6c] sm:$0xff]
        %v540 = vld [vmem:[#allocation2 + $0x74] sm:$0xf]
        %v541 = vld [vmem:[#allocation2 + $0x78] sm:$0xff]
        %v542 = vld [vmem:[#allocation2 + $0x80] sm:$0xf]
        %v543 = vld [vmem:[#allocation2 + $0x84] sm:$0xff]
        %v544 = vld [vmem:[#allocation2 + $0x8c] sm:$0xf]
        %v545 = vld [vmem:[#allocation2 + $0x90] sm:$0xff]
        %v546 = vld [vmem:[#allocation2 + $0x98] sm:$0xf]
        %v547 = vld [vmem:[#allocation2 + $0x9c] sm:$0xff]
        %v548 = vld [vmem:[#allocation2 + $0xa4] sm:$0xf]
        %v549 = vld [vmem:[#allocation2 + $0xa8] sm:$0xff]
        %v550 = vld [vmem:[#allocation2 + $0xb0] sm:$0xf]
        %v551 = vld [vmem:[#allocation2 + $0xb4] sm:$0xff]
        %v552 = vld [vmem:[#allocation2 + $0xbc] sm:$0xf]
        %v585 = vunpack.c.l.b16 %v521
        %v586 = vunpack.c.h.b16 %v521
        %v587 = vunpack.c.l.b16 %v522
        %v588 = vunpack.c.l.b16 %v523
        %v589 = vunpack.c.h.b16 %v523
        %v590 = vunpack.c.l.b16 %v524
        %v591 = vunpack.c.l.b16 %v525
        %v592 = vunpack.c.h.b16 %v525
        %v593 = vunpack.c.l.b16 %v526
        %v594 = vunpack.c.l.b16 %v527
        %v595 = vunpack.c.h.b16 %v527
        %v596 = vunpack.c.l.b16 %v528
        %v597 = vunpack.c.l.b16 %v529
        %v598 = vunpack.c.h.b16 %v529
        %v599 = vunpack.c.l.b16 %v530
        %v600 = vunpack.c.l.b16 %v531
        %v601 = vunpack.c.h.b16 %v531
        %v602 = vunpack.c.l.b16 %v532
        %v603 = vunpack.c.l.b16 %v533
        %v604 = vunpack.c.h.b16 %v533
        %v605 = vunpack.c.l.b16 %v534
        %v606 = vunpack.c.l.b16 %v535
        %v607 = vunpack.c.h.b16 %v535
        %v608 = vunpack.c.l.b16 %v536
        %v609 = vunpack.c.l.b16 %v537
        %v610 = vunpack.c.h.b16 %v537
        %v611 = vunpack.c.l.b16 %v538
        %v612 = vunpack.c.l.b16 %v539
        %v613 = vunpack.c.h.b16 %v539
        %v614 = vunpack.c.l.b16 %v540
        %v615 = vunpack.c.l.b16 %v541
        %v616 = vunpack.c.h.b16 %v541
        %v617 = vunpack.c.l.b16 %v542
        %v618 = vunpack.c.l.b16 %v543
        %v619 = vunpack.c.h.b16 %v543
        %v620 = vunpack.c.l.b16 %v544
        %v621 = vunpack.c.l.b16 %v545
        %v622 = vunpack.c.h.b16 %v545
        %v623 = vunpack.c.l.b16 %v546
        %v624 = vunpack.c.l.b16 %v547
        %v625 = vunpack.c.h.b16 %v547
        %v626 = vunpack.c.l.b16 %v548
        %v627 = vunpack.c.l.b16 %v549
        %v628 = vunpack.c.h.b16 %v549
        %v629 = vunpack.c.l.b16 %v550
        %v630 = vunpack.c.l.b16 %v551
        %v631 = vunpack.c.h.b16 %v551
        %v632 = vunpack.c.l.b16 %v552
        %v633 = vpack.c.b16 %v588, %v585
        %v634 = vpack.c.b16 %v589, %v586
        %v635 = vpack.c.b16 %v590, %v587
        %v636 = vpack.c.b16 %v594, %v591
        %v637 = vpack.c.b16 %v595, %v592
        %v638 = vpack.c.b16 %v596, %v593
        %v639 = vpack.c.b16 %v600, %v597
        %v640 = vpack.c.b16 %v601, %v598
        %v641 = vpack.c.b16 %v602, %v599
        %v642 = vpack.c.b16 %v606, %v603
        %v643 = vpack.c.b16 %v607, %v604
        %v644 = vpack.c.b16 %v608, %v605
        %v645 = vpack.c.b16 %v612, %v609
        %v646 = vpack.c.b16 %v613, %v610
        %v647 = vpack.c.b16 %v614, %v611
        %v648 = vpack.c.b16 %v618, %v615
        %v649 = vpack.c.b16 %v619, %v616
        %v650 = vpack.c.b16 %v620, %v617
        %v651 = vpack.c.b16 %v624, %v621
        %v652 = vpack.c.b16 %v625, %v622
        %v653 = vpack.c.b16 %v626, %v623
        %v654 = vpack.c.b16 %v630, %v627
        %v655 = vpack.c.b16 %v631, %v628
        %v656 = vpack.c.b16 %v632, %v629
        %681 = vmatprep.subr.bf16.mxu0 %v634
        %682 = vmatpush1.bf16.msra.mxu0 %v633
        %683 = vmatprep.subr.bf16.mxu0 %v637
        %684 = vmatpush1.bf16.msra.mxu0 %v636
        %685 = vmatprep.subr.bf16.mxu0 %v640
        %686 = vmatpush1.bf16.msra.mxu0 %v639
        %687 = vmatprep.subr.bf16.mxu0 %v643
        %688 = vmatpush1.bf16.msra.mxu0 %v642
        %689 = vmatprep.subr.bf16.mxu0 %v646
        %690 = vmatpush1.bf16.msra.mxu0 %v645
        %691 = vmatprep.subr.bf16.mxu0 %v649
        %692 = vmatpush1.bf16.msra.mxu0 %v648
        %693 = vmatprep.subr.bf16.mxu0 %v652
        %694 = vmatpush1.bf16.msra.mxu0 %v651
        %695 = vmatprep.subr.bf16.mxu0 %v655
        %696 = vmatpush1.bf16.msra.mxu0 %v654
        %697 = vmatprep.subr.bf16.mxu0 0
        %698 = vmatpush1.bf16.msra.mxu0 0
        %699 = vmatprep.subr.bf16.mxu0 0
        %700 = vmatpush1.bf16.msra.mxu0 0
        %701 = vmatprep.subr.bf16.mxu0 0
        %702 = vmatpush1.bf16.msra.mxu0 0
        %703 = vmatprep.subr.bf16.mxu0 0
        %704 = vmatpush1.bf16.msra.mxu0 0
        %705 = vmatprep.subr.bf16.mxu0 0
        %706 = vmatpush1.bf16.msra.mxu0 0
        %707 = vmatprep.subr.bf16.mxu0 0
        %708 = vmatpush1.bf16.msra.mxu0 0
        %709 = vmatprep.subr.bf16.mxu0 0
        %710 = vmatpush1.bf16.msra.mxu0 0
        %711 = vmatprep.subr.bf16.mxu0 0
        %712 = vmatpush1.bf16.msra.mxu0 0
        %713 = vmatprep.mubr.bf16.mxu0 0
        %714 = vmatmul.mubr.bf16.gmra.mrb[0].mxu0 %v520
        %v715 = vpop.f32.mrb[0].mxu0
        %v716 = vadd.f32 0.0, %v715
        %v717 = vpop.f32.mrb[0].mxu0
        %v718 = vadd.f32 0.0, %v717
        %v719 = vpop.f32.mrb[0].mxu0
        %v720 = vadd.f32 0.0, %v719
        %v721 = vpop.f32.mrb[0].mxu0
        %v722 = vadd.f32 0.0, %v721
        %723 = vdwg.mxu0
        %724 = vmatprep.subr.bf16.mxu0 0
        %725 = vmatpush1.bf16.msra.mxu0 %v635
        %726 = vmatprep.subr.bf16.mxu0 0
        %727 = vmatpush1.bf16.msra.mxu0 %v638
        %728 = vmatprep.subr.bf16.mxu0 0
        %729 = vmatpush1.bf16.msra.mxu0 %v641
        %730 = vmatprep.subr.bf16.mxu0 0
        %731 = vmatpush1.bf16.msra.mxu0 %v644
        %732 = vmatprep.subr.bf16.mxu0 0
        %733 = vmatpush1.bf16.msra.mxu0 %v647
        %734 = vmatprep.subr.bf16.mxu0 0
        %735 = vmatpush1.bf16.msra.mxu0 %v650
        %736 = vmatprep.subr.bf16.mxu0 0
        %737 = vmatpush1.bf16.msra.mxu0 %v653
        %738 = vmatprep.subr.bf16.mxu0 0
        %739 = vmatpush1.bf16.msra.mxu0 %v656
        %740 = vmatprep.subr.bf16.mxu0 0
        %741 = vmatpush1.bf16.msra.mxu0 0
        %742 = vmatprep.subr.bf16.mxu0 0
        %743 = vmatpush1.bf16.msra.mxu0 0
        %744 = vmatprep.subr.bf16.mxu0 0
        %745 = vmatpush1.bf16.msra.mxu0 0
        %746 = vmatprep.subr.bf16.mxu0 0
        %747 = vmatpush1.bf16.msra.mxu0 0
        %748 = vmatprep.subr.bf16.mxu0 0
        %749 = vmatpush1.bf16.msra.mxu0 0
        %750 = vmatprep.subr.bf16.mxu0 0
        %751 = vmatpush1.bf16.msra.mxu0 0
        %752 = vmatprep.subr.bf16.mxu0 0
        %753 = vmatpush1.bf16.msra.mxu0 0
        %754 = vmatprep.subr.bf16.mxu0 0
        %755 = vmatpush1.bf16.msra.mxu0 0
        %756 = vmatprep.mubr.bf16.mxu0 0
        %757 = vmatmul.mubr.bf16.gmra.mrb[0].mxu0 %v520
        %v758 = vpop.f32.mrb[0].mxu0
        %v759 = vadd.f32 0.0, %v758
        %v760 = vpop.f32.mrb[0].mxu0
        %v761 = vpop.f32.mrb[0].mxu0
        %v762 = vadd.f32 0.0, %v761
        %v763 = vpop.f32.mrb[0].mxu0
        %764 = vdwg.mxu0
        %v765 = vmul.f32 %v716, 0.17677669
        %v766 = vmul.f32 %v720, 0.17677669
        %769 = vrot.lane.b32.xlu0 %v765, 96
        %v770 = vpop.permute.xlu0 %769
        %771 = vrot.lane.b32.xlu0 %v766, 96
        %v772 = vpop.permute.xlu0 %771
        %775 = vrot.lane.b32.xlu0 %v765, 64
        %v776 = vpop.permute.xlu0 %775
        %777 = vrot.lane.b32.xlu0 %v766, 64
        %v778 = vpop.permute.xlu0 %777
        %781 = vrot.lane.b32.xlu0 %v765, 32
        %v782 = vpop.permute.xlu0 %781
        %783 = vrot.lane.b32.xlu0 %v766, 32
        %v784 = vpop.permute.xlu0 %783
        %v787 = vcombine.low %v765, %v776
        %v788 = vcombine.high %v765, %v776
        %v790 = vunpack.c.l.s4 1983009808
        %v791 = vunpack.c.0.s8 %v790
        %v792 = vlaneseq
        %v793 = vshrl.u32 %v792, 7
        %v794 = vsub.s32 %v791, %v793
        %v795 = vrot.slane %v787, %v794
        %v797 = vunpack.c.l.s4 1983009808
        %v798 = vunpack.c.0.s8 %v797
        %v799 = vlaneseq
        %v800 = vshrl.u32 %v799, 7
        %v801 = vsub.s32 %v798, %v800
        %v802 = vrot.slane %v788, %v801
        %v803 = vcombine.low %v770, %v782
        %v804 = vcombine.high %v770, %v782
        %v806 = vunpack.c.l.s4 1983009808
        %v807 = vunpack.c.0.s8 %v806
        %v808 = vlaneseq
        %v809 = vshrl.u32 %v808, 7
        %v810 = vsub.s32 %v807, %v809
        %v811 = vrot.slane %v803, %v810
        %v813 = vunpack.c.l.s4 1983009808
        %v814 = vunpack.c.0.s8 %v813
        %v815 = vlaneseq
        %v816 = vshrl.u32 %v815, 7
        %v817 = vsub.s32 %v814, %v816
        %v818 = vrot.slane %v804, %v817
        %v819 = vcombine.low %v795, %v811
        %v820 = vcombine.high %v795, %v811
        %v822 = vunpack.c.l.s4 1934713408
        %v823 = vunpack.c.0.s8 %v822
        %v824 = vlaneseq
        %v825 = vshrl.u32 %v824, 7
        %v826 = vsub.s32 %v823, %v825
        %v827 = vrot.slane %v819, %v826
        %v829 = vunpack.c.l.s4 1934713408
        %v830 = vunpack.c.0.s8 %v829
        %v831 = vlaneseq
        %v832 = vshrl.u32 %v831, 7
        %v833 = vsub.s32 %v830, %v832
        %v834 = vrot.slane %v820, %v833
        %v835 = vcombine.low %v802, %v818
        %v836 = vcombine.high %v802, %v818
        %v838 = vunpack.c.l.s4 1934713408
        %v839 = vunpack.c.0.s8 %v838
        %v840 = vlaneseq
        %v841 = vshrl.u32 %v840, 7
        %v842 = vsub.s32 %v839, %v841
        %v843 = vrot.slane %v835, %v842
        %v845 = vunpack.c.l.s4 1934713408
        %v846 = vunpack.c.0.s8 %v845
        %v847 = vlaneseq
        %v848 = vshrl.u32 %v847, 7
        %v849 = vsub.s32 %v846, %v848
        %v850 = vrot.slane %v836, %v849
        %v851 = vcombine.high %v827, 0.0
        %v852 = vcombine.high %v834, 0.0
        %v853 = vcombine.high %v843, 0.0
        %v854 = vcombine.high %v850, 0.0
        %v855 = vcombine.low %v766, %v778
        %v856 = vcombine.high %v766, %v778
        %v858 = vunpack.c.l.s4 1983009808
        %v859 = vunpack.c.0.s8 %v858
        %v860 = vlaneseq
        %v861 = vshrl.u32 %v860, 7
        %v862 = vsub.s32 %v859, %v861
        %v863 = vrot.slane %v855, %v862
        %v865 = vunpack.c.l.s4 1983009808
        %v866 = vunpack.c.0.s8 %v865
        %v867 = vlaneseq
        %v868 = vshrl.u32 %v867, 7
        %v869 = vsub.s32 %v866, %v868
        %v870 = vrot.slane %v856, %v869
        %v871 = vcombine.low %v772, %v784
        %v872 = vcombine.high %v772, %v784
        %v874 = vunpack.c.l.s4 1983009808
        %v875 = vunpack.c.0.s8 %v874
        %v876 = vlaneseq
        %v877 = vshrl.u32 %v876, 7
        %v878 = vsub.s32 %v875, %v877
        %v879 = vrot.slane %v871, %v878
        %v881 = vunpack.c.l.s4 1983009808
        %v882 = vunpack.c.0.s8 %v881
        %v883 = vlaneseq
        %v884 = vshrl.u32 %v883, 7
        %v885 = vsub.s32 %v882, %v884
        %v886 = vrot.slane %v872, %v885
        %v887 = vcombine.low %v863, %v879
        %v888 = vcombine.high %v863, %v879
        %v890 = vunpack.c.l.s4 1934713408
        %v891 = vunpack.c.0.s8 %v890
        %v892 = vlaneseq
        %v893 = vshrl.u32 %v892, 7
        %v894 = vsub.s32 %v891, %v893
        %v895 = vrot.slane %v887, %v894
        %v897 = vunpack.c.l.s4 1934713408
        %v898 = vunpack.c.0.s8 %v897
        %v899 = vlaneseq
        %v900 = vshrl.u32 %v899, 7
        %v901 = vsub.s32 %v898, %v900
        %v902 = vrot.slane %v888, %v901
        %v903 = vcombine.low %v870, %v886
        %v904 = vcombine.high %v870, %v886
        %v906 = vunpack.c.l.s4 1934713408
        %v907 = vunpack.c.0.s8 %v906
        %v908 = vlaneseq
        %v909 = vshrl.u32 %v908, 7
        %v910 = vsub.s32 %v907, %v909
        %v911 = vrot.slane %v903, %v910
        %v913 = vunpack.c.l.s4 1934713408
        %v914 = vunpack.c.0.s8 %v913
        %v915 = vlaneseq
        %v916 = vshrl.u32 %v915, 7
        %v917 = vsub.s32 %v914, %v916
        %v918 = vrot.slane %v904, %v917
        %v919 = vcombine.high %v895, 0.0
        %v920 = vcombine.high %v902, 0.0
        %v921 = vcombine.high %v911, 0.0
        %v922 = vcombine.high %v918, 0.0
        %v923 = vcombine.low %v827, %v834
        %v925 = vunpack.c.l.s4 1983009808
        %v926 = vunpack.c.0.s8 %v925
        %v927 = vlaneseq
        %v928 = vshrl.u32 %v927, 7
        %v929 = vsub.s32 %v926, %v928
        %v930 = vrot.slane %v923, %v929
        %v931 = vcombine.low %v851, %v852
        %v933 = vunpack.c.l.s4 1983009808
        %v934 = vunpack.c.0.s8 %v933
        %v935 = vlaneseq
        %v936 = vshrl.u32 %v935, 7
        %v937 = vsub.s32 %v934, %v936
        %v938 = vrot.slane %v931, %v937
        %v939 = vcombine.low %v843, %v850
        %v941 = vunpack.c.l.s4 1983009808
        %v942 = vunpack.c.0.s8 %v941
        %v943 = vlaneseq
        %v944 = vshrl.u32 %v943, 7
        %v945 = vsub.s32 %v942, %v944
        %v946 = vrot.slane %v939, %v945
        %v947 = vcombine.low %v853, %v854
        %v949 = vunpack.c.l.s4 1983009808
        %v950 = vunpack.c.0.s8 %v949
        %v951 = vlaneseq
        %v952 = vshrl.u32 %v951, 7
        %v953 = vsub.s32 %v950, %v952
        %v954 = vrot.slane %v947, %v953
        %v955 = vcombine.low %v930, %v938
        %v956 = vcombine.high %v930, %v938
        %v958 = vunpack.c.l.s4 1934713408
        %v959 = vunpack.c.0.s8 %v958
        %v960 = vlaneseq
        %v961 = vshrl.u32 %v960, 7
        %v962 = vsub.s32 %v959, %v961
        %v963 = vrot.slane %v955, %v962
        %v965 = vunpack.c.l.s4 1934713408
        %v966 = vunpack.c.0.s8 %v965
        %v967 = vlaneseq
        %v968 = vshrl.u32 %v967, 7
        %v969 = vsub.s32 %v966, %v968
        %v970 = vrot.slane %v956, %v969
        %v971 = vcombine.low %v946, %v954
        %v972 = vcombine.high %v946, %v954
        %v974 = vunpack.c.l.s4 1934713408
        %v975 = vunpack.c.0.s8 %v974
        %v976 = vlaneseq
        %v977 = vshrl.u32 %v976, 7
        %v978 = vsub.s32 %v975, %v977
        %v979 = vrot.slane %v971, %v978
        %v981 = vunpack.c.l.s4 1934713408
        %v982 = vunpack.c.0.s8 %v981
        %v983 = vlaneseq
        %v984 = vshrl.u32 %v983, 7
        %v985 = vsub.s32 %v982, %v984
        %v986 = vrot.slane %v972, %v985
        %v987 = vcombine.low %v963, %v979
        %v988 = vcombine.high %v963, %v979
        %v989 = vcombine.low %v970, %v986
        %v990 = vcombine.high %v970, %v986
        %v991 = vcombine.low %v895, %v902
        %v993 = vunpack.c.l.s4 1983009808
        %v994 = vunpack.c.0.s8 %v993
        %v995 = vlaneseq
        %v996 = vshrl.u32 %v995, 7
        %v997 = vsub.s32 %v994, %v996
        %v998 = vrot.slane %v991, %v997
        %v999 = vcombine.low %v919, %v920
        %v1001 = vunpack.c.l.s4 1983009808
        %v1002 = vunpack.c.0.s8 %v1001
        %v1003 = vlaneseq
        %v1004 = vshrl.u32 %v1003, 7
        %v1005 = vsub.s32 %v1002, %v1004
        %v1006 = vrot.slane %v999, %v1005
        %v1007 = vcombine.low %v911, %v918
        %v1009 = vunpack.c.l.s4 1983009808
        %v1010 = vunpack.c.0.s8 %v1009
        %v1011 = vlaneseq
        %v1012 = vshrl.u32 %v1011, 7
        %v1013 = vsub.s32 %v1010, %v1012
        %v1014 = vrot.slane %v1007, %v1013
        %v1015 = vcombine.low %v921, %v922
        %v1017 = vunpack.c.l.s4 1983009808
        %v1018 = vunpack.c.0.s8 %v1017
        %v1019 = vlaneseq
        %v1020 = vshrl.u32 %v1019, 7
        %v1021 = vsub.s32 %v1018, %v1020
        %v1022 = vrot.slane %v1015, %v1021
        %v1023 = vcombine.low %v998, %v1006
        %v1024 = vcombine.high %v998, %v1006
        %v1026 = vunpack.c.l.s4 1934713408
        %v1027 = vunpack.c.0.s8 %v1026
        %v1028 = vlaneseq
        %v1029 = vshrl.u32 %v1028, 7
        %v1030 = vsub.s32 %v1027, %v1029
        %v1031 = vrot.slane %v1023, %v1030
        %v1033 = vunpack.c.l.s4 1934713408
        %v1034 = vunpack.c.0.s8 %v1033
        %v1035 = vlaneseq
        %v1036 = vshrl.u32 %v1035, 7
        %v1037 = vsub.s32 %v1034, %v1036
        %v1038 = vrot.slane %v1024, %v1037
        %v1039 = vcombine.low %v1014, %v1022
        %v1040 = vcombine.high %v1014, %v1022
        %v1042 = vunpack.c.l.s4 1934713408
        %v1043 = vunpack.c.0.s8 %v1042
        %v1044 = vlaneseq
        %v1045 = vshrl.u32 %v1044, 7
        %v1046 = vsub.s32 %v1043, %v1045
        %v1047 = vrot.slane %v1039, %v1046
        %v1049 = vunpack.c.l.s4 1934713408
        %v1050 = vunpack.c.0.s8 %v1049
        %v1051 = vlaneseq
        %v1052 = vshrl.u32 %v1051, 7
        %v1053 = vsub.s32 %v1050, %v1052
        %v1054 = vrot.slane %v1040, %v1053
        %v1055 = vcombine.low %v1031, %v1047
        %v1056 = vcombine.high %v1031, %v1047
        %v1057 = vcombine.low %v1038, %v1054
        %v1058 = vcombine.high %v1038, %v1054
        %1061 = vrot.lane.b32.xlu0 %v718, 96
        %v1062 = vpop.permute.xlu0 %1061
        %1063 = vrot.lane.b32.xlu0 %v722, 96
        %v1064 = vpop.permute.xlu0 %1063
        %1067 = vrot.lane.b32.xlu0 %v718, 64
        %v1068 = vpop.permute.xlu0 %1067
        %1069 = vrot.lane.b32.xlu0 %v722, 64
        %v1070 = vpop.permute.xlu0 %1069
        %1073 = vrot.lane.b32.xlu0 %v718, 32
        %v1074 = vpop.permute.xlu0 %1073
        %1075 = vrot.lane.b32.xlu0 %v722, 32
        %v1076 = vpop.permute.xlu0 %1075
        %v1079 = vcombine.low %v718, %v1068
        %v1080 = vcombine.high %v718, %v1068
        %v1082 = vunpack.c.l.s4 1983009808
        %v1083 = vunpack.c.0.s8 %v1082
        %v1084 = vlaneseq
        %v1085 = vshrl.u32 %v1084, 7
        %v1086 = vsub.s32 %v1083, %v1085
        %v1087 = vrot.slane %v1079, %v1086
        %v1089 = vunpack.c.l.s4 1983009808
        %v1090 = vunpack.c.0.s8 %v1089
        %v1091 = vlaneseq
        %v1092 = vshrl.u32 %v1091, 7
        %v1093 = vsub.s32 %v1090, %v1092
        %v1094 = vrot.slane %v1080, %v1093
        %v1095 = vcombine.low %v1062, %v1074
        %v1096 = vcombine.high %v1062, %v1074
        %v1098 = vunpack.c.l.s4 1983009808
        %v1099 = vunpack.c.0.s8 %v1098
        %v1100 = vlaneseq
        %v1101 = vshrl.u32 %v1100, 7
        %v1102 = vsub.s32 %v1099, %v1101
        %v1103 = vrot.slane %v1095, %v1102
        %v1105 = vunpack.c.l.s4 1983009808
        %v1106 = vunpack.c.0.s8 %v1105
        %v1107 = vlaneseq
        %v1108 = vshrl.u32 %v1107, 7
        %v1109 = vsub.s32 %v1106, %v1108
        %v1110 = vrot.slane %v1096, %v1109
        %v1111 = vcombine.low %v1087, %v1103
        %v1112 = vcombine.high %v1087, %v1103
        %v1114 = vunpack.c.l.s4 1934713408
        %v1115 = vunpack.c.0.s8 %v1114
        %v1116 = vlaneseq
        %v1117 = vshrl.u32 %v1116, 7
        %v1118 = vsub.s32 %v1115, %v1117
        %v1119 = vrot.slane %v1111, %v1118
        %v1121 = vunpack.c.l.s4 1934713408
        %v1122 = vunpack.c.0.s8 %v1121
        %v1123 = vlaneseq
        %v1124 = vshrl.u32 %v1123, 7
        %v1125 = vsub.s32 %v1122, %v1124
        %v1126 = vrot.slane %v1112, %v1125
        %v1127 = vcombine.low %v1094, %v1110
        %v1128 = vcombine.high %v1094, %v1110
        %v1130 = vunpack.c.l.s4 1934713408
        %v1131 = vunpack.c.0.s8 %v1130
        %v1132 = vlaneseq
        %v1133 = vshrl.u32 %v1132, 7
        %v1134 = vsub.s32 %v1131, %v1133
        %v1135 = vrot.slane %v1127, %v1134
        %v1137 = vunpack.c.l.s4 1934713408
        %v1138 = vunpack.c.0.s8 %v1137
        %v1139 = vlaneseq
        %v1140 = vshrl.u32 %v1139, 7
        %v1141 = vsub.s32 %v1138, %v1140
        %v1142 = vrot.slane %v1128, %v1141
        %v1143 = vcombine.high %v1119, 0.0
        %v1144 = vcombine.high %v1126, 0.0
        %v1145 = vcombine.high %v1135, 0.0
        %v1146 = vcombine.high %v1142, 0.0
        %v1147 = vcombine.low %v722, %v1070
        %v1148 = vcombine.high %v722, %v1070
        %v1150 = vunpack.c.l.s4 1983009808
        %v1151 = vunpack.c.0.s8 %v1150
        %v1152 = vlaneseq
        %v1153 = vshrl.u32 %v1152, 7
        %v1154 = vsub.s32 %v1151, %v1153
        %v1155 = vrot.slane %v1147, %v1154
        %v1157 = vunpack.c.l.s4 1983009808
        %v1158 = vunpack.c.0.s8 %v1157
        %v1159 = vlaneseq
        %v1160 = vshrl.u32 %v1159, 7
        %v1161 = vsub.s32 %v1158, %v1160
        %v1162 = vrot.slane %v1148, %v1161
        %v1163 = vcombine.low %v1064, %v1076
        %v1164 = vcombine.high %v1064, %v1076
        %v1166 = vunpack.c.l.s4 1983009808
        %v1167 = vunpack.c.0.s8 %v1166
        %v1168 = vlaneseq
        %v1169 = vshrl.u32 %v1168, 7
        %v1170 = vsub.s32 %v1167, %v1169
        %v1171 = vrot.slane %v1163, %v1170
        %v1173 = vunpack.c.l.s4 1983009808
        %v1174 = vunpack.c.0.s8 %v1173
        %v1175 = vlaneseq
        %v1176 = vshrl.u32 %v1175, 7
        %v1177 = vsub.s32 %v1174, %v1176
        %v1178 = vrot.slane %v1164, %v1177
        %v1179 = vcombine.low %v1155, %v1171
        %v1180 = vcombine.high %v1155, %v1171
        %v1182 = vunpack.c.l.s4 1934713408
        %v1183 = vunpack.c.0.s8 %v1182
        %v1184 = vlaneseq
        %v1185 = vshrl.u32 %v1184, 7
        %v1186 = vsub.s32 %v1183, %v1185
        %v1187 = vrot.slane %v1179, %v1186
        %v1189 = vunpack.c.l.s4 1934713408
        %v1190 = vunpack.c.0.s8 %v1189
        %v1191 = vlaneseq
        %v1192 = vshrl.u32 %v1191, 7
        %v1193 = vsub.s32 %v1190, %v1192
        %v1194 = vrot.slane %v1180, %v1193
        %v1195 = vcombine.low %v1162, %v1178
        %v1196 = vcombine.high %v1162, %v1178
        %v1198 = vunpack.c.l.s4 1934713408
        %v1199 = vunpack.c.0.s8 %v1198
        %v1200 = vlaneseq
        %v1201 = vshrl.u32 %v1200, 7
        %v1202 = vsub.s32 %v1199, %v1201
        %v1203 = vrot.slane %v1195, %v1202
        %v1205 = vunpack.c.l.s4 1934713408
        %v1206 = vunpack.c.0.s8 %v1205
        %v1207 = vlaneseq
        %v1208 = vshrl.u32 %v1207, 7
        %v1209 = vsub.s32 %v1206, %v1208
        %v1210 = vrot.slane %v1196, %v1209
        %v1211 = vcombine.high %v1187, 0.0
        %v1212 = vcombine.high %v1194, 0.0
        %v1213 = vcombine.high %v1203, 0.0
        %v1214 = vcombine.high %v1210, 0.0
        %v1215 = vcombine.low %v1119, %v1126
        %v1217 = vunpack.c.l.s4 1983009808
        %v1218 = vunpack.c.0.s8 %v1217
        %v1219 = vlaneseq
        %v1220 = vshrl.u32 %v1219, 7
        %v1221 = vsub.s32 %v1218, %v1220
        %v1222 = vrot.slane %v1215, %v1221
        %v1223 = vcombine.low %v1143, %v1144
        %v1225 = vunpack.c.l.s4 1983009808
        %v1226 = vunpack.c.0.s8 %v1225
        %v1227 = vlaneseq
        %v1228 = vshrl.u32 %v1227, 7
        %v1229 = vsub.s32 %v1226, %v1228
        %v1230 = vrot.slane %v1223, %v1229
        %v1231 = vcombine.low %v1135, %v1142
        %v1233 = vunpack.c.l.s4 1983009808
        %v1234 = vunpack.c.0.s8 %v1233
        %v1235 = vlaneseq
        %v1236 = vshrl.u32 %v1235, 7
        %v1237 = vsub.s32 %v1234, %v1236
        %v1238 = vrot.slane %v1231, %v1237
        %v1239 = vcombine.low %v1145, %v1146
        %v1241 = vunpack.c.l.s4 1983009808
        %v1242 = vunpack.c.0.s8 %v1241
        %v1243 = vlaneseq
        %v1244 = vshrl.u32 %v1243, 7
        %v1245 = vsub.s32 %v1242, %v1244
        %v1246 = vrot.slane %v1239, %v1245
        %v1247 = vcombine.low %v1222, %v1230
        %v1248 = vcombine.high %v1222, %v1230
        %v1250 = vunpack.c.l.s4 1934713408
        %v1251 = vunpack.c.0.s8 %v1250
        %v1252 = vlaneseq
        %v1253 = vshrl.u32 %v1252, 7
        %v1254 = vsub.s32 %v1251, %v1253
        %v1255 = vrot.slane %v1247, %v1254
        %v1257 = vunpack.c.l.s4 1934713408
        %v1258 = vunpack.c.0.s8 %v1257
        %v1259 = vlaneseq
        %v1260 = vshrl.u32 %v1259, 7
        %v1261 = vsub.s32 %v1258, %v1260
        %v1262 = vrot.slane %v1248, %v1261
        %v1263 = vcombine.low %v1238, %v1246
        %v1264 = vcombine.high %v1238, %v1246
        %v1266 = vunpack.c.l.s4 1934713408
        %v1267 = vunpack.c.0.s8 %v1266
        %v1268 = vlaneseq
        %v1269 = vshrl.u32 %v1268, 7
        %v1270 = vsub.s32 %v1267, %v1269
        %v1271 = vrot.slane %v1263, %v1270
        %v1273 = vunpack.c.l.s4 1934713408
        %v1274 = vunpack.c.0.s8 %v1273
        %v1275 = vlaneseq
        %v1276 = vshrl.u32 %v1275, 7
        %v1277 = vsub.s32 %v1274, %v1276
        %v1278 = vrot.slane %v1264, %v1277
        %v1279 = vcombine.low %v1255, %v1271
        %v1280 = vcombine.high %v1255, %v1271
        %v1281 = vcombine.low %v1262, %v1278
        %v1282 = vcombine.high %v1262, %v1278
        %v1283 = vcombine.low %v1187, %v1194
        %v1285 = vunpack.c.l.s4 1983009808
        %v1286 = vunpack.c.0.s8 %v1285
        %v1287 = vlaneseq
        %v1288 = vshrl.u32 %v1287, 7
        %v1289 = vsub.s32 %v1286, %v1288
        %v1290 = vrot.slane %v1283, %v1289
        %v1291 = vcombine.low %v1211, %v1212
        %v1293 = vunpack.c.l.s4 1983009808
        %v1294 = vunpack.c.0.s8 %v1293
        %v1295 = vlaneseq
        %v1296 = vshrl.u32 %v1295, 7
        %v1297 = vsub.s32 %v1294, %v1296
        %v1298 = vrot.slane %v1291, %v1297
        %v1299 = vcombine.low %v1203, %v1210
        %v1301 = vunpack.c.l.s4 1983009808
        %v1302 = vunpack.c.0.s8 %v1301
        %v1303 = vlaneseq
        %v1304 = vshrl.u32 %v1303, 7
        %v1305 = vsub.s32 %v1302, %v1304
        %v1306 = vrot.slane %v1299, %v1305
        %v1307 = vcombine.low %v1213, %v1214
        %v1309 = vunpack.c.l.s4 1983009808
        %v1310 = vunpack.c.0.s8 %v1309
        %v1311 = vlaneseq
        %v1312 = vshrl.u32 %v1311, 7
        %v1313 = vsub.s32 %v1310, %v1312
        %v1314 = vrot.slane %v1307, %v1313
        %v1315 = vcombine.low %v1290, %v1298
        %v1316 = vcombine.high %v1290, %v1298
        %v1318 = vunpack.c.l.s4 1934713408
        %v1319 = vunpack.c.0.s8 %v1318
        %v1320 = vlaneseq
        %v1321 = vshrl.u32 %v1320, 7
        %v1322 = vsub.s32 %v1319, %v1321
        %v1323 = vrot.slane %v1315, %v1322
        %v1325 = vunpack.c.l.s4 1934713408
        %v1326 = vunpack.c.0.s8 %v1325
        %v1327 = vlaneseq
        %v1328 = vshrl.u32 %v1327, 7
        %v1329 = vsub.s32 %v1326, %v1328
        %v1330 = vrot.slane %v1316, %v1329
        %v1331 = vcombine.low %v1306, %v1314
        %v1332 = vcombine.high %v1306, %v1314
        %v1334 = vunpack.c.l.s4 1934713408
        %v1335 = vunpack.c.0.s8 %v1334
        %v1336 = vlaneseq
        %v1337 = vshrl.u32 %v1336, 7
        %v1338 = vsub.s32 %v1335, %v1337
        %v1339 = vrot.slane %v1331, %v1338
        %v1341 = vunpack.c.l.s4 1934713408
        %v1342 = vunpack.c.0.s8 %v1341
        %v1343 = vlaneseq
        %v1344 = vshrl.u32 %v1343, 7
        %v1345 = vsub.s32 %v1342, %v1344
        %v1346 = vrot.slane %v1332, %v1345
        %v1347 = vcombine.low %v1323, %v1339
        %v1348 = vcombine.high %v1323, %v1339
        %v1349 = vcombine.low %v1330, %v1346
        %v1350 = vcombine.high %v1330, %v1346
        %1353 = vrot.lane.b32.xlu0 %v759, 96
        %v1354 = vpop.permute.xlu0 %1353
        %1355 = vrot.lane.b32.xlu0 %v762, 96
        %v1356 = vpop.permute.xlu0 %1355
        %1359 = vrot.lane.b32.xlu0 %v759, 64
        %v1360 = vpop.permute.xlu0 %1359
        %1361 = vrot.lane.b32.xlu0 %v762, 64
        %v1362 = vpop.permute.xlu0 %1361
        %1365 = vrot.lane.b32.xlu0 %v759, 32
        %v1366 = vpop.permute.xlu0 %1365
        %1367 = vrot.lane.b32.xlu0 %v762, 32
        %v1368 = vpop.permute.xlu0 %1367
        %v1371 = vcombine.low %v759, %v1360
        %v1372 = vcombine.high %v759, %v1360
        %v1374 = vunpack.c.l.s4 1983009808
        %v1375 = vunpack.c.0.s8 %v1374
        %v1376 = vlaneseq
        %v1377 = vshrl.u32 %v1376, 7
        %v1378 = vsub.s32 %v1375, %v1377
        %v1379 = vrot.slane %v1371, %v1378
        %v1381 = vunpack.c.l.s4 1983009808
        %v1382 = vunpack.c.0.s8 %v1381
        %v1383 = vlaneseq
        %v1384 = vshrl.u32 %v1383, 7
        %v1385 = vsub.s32 %v1382, %v1384
        %v1386 = vrot.slane %v1372, %v1385
        %v1387 = vcombine.low %v1354, %v1366
        %v1388 = vcombine.high %v1354, %v1366
        %v1390 = vunpack.c.l.s4 1983009808
        %v1391 = vunpack.c.0.s8 %v1390
        %v1392 = vlaneseq
        %v1393 = vshrl.u32 %v1392, 7
        %v1394 = vsub.s32 %v1391, %v1393
        %v1395 = vrot.slane %v1387, %v1394
        %v1397 = vunpack.c.l.s4 1983009808
        %v1398 = vunpack.c.0.s8 %v1397
        %v1399 = vlaneseq
        %v1400 = vshrl.u32 %v1399, 7
        %v1401 = vsub.s32 %v1398, %v1400
        %v1402 = vrot.slane %v1388, %v1401
        %v1403 = vcombine.low %v1379, %v1395
        %v1404 = vcombine.high %v1379, %v1395
        %v1406 = vunpack.c.l.s4 1934713408
        %v1407 = vunpack.c.0.s8 %v1406
        %v1408 = vlaneseq
        %v1409 = vshrl.u32 %v1408, 7
        %v1410 = vsub.s32 %v1407, %v1409
        %v1411 = vrot.slane %v1403, %v1410
        %v1413 = vunpack.c.l.s4 1934713408
        %v1414 = vunpack.c.0.s8 %v1413
        %v1415 = vlaneseq
        %v1416 = vshrl.u32 %v1415, 7
        %v1417 = vsub.s32 %v1414, %v1416
        %v1418 = vrot.slane %v1404, %v1417
        %v1419 = vcombine.low %v1386, %v1402
        %v1420 = vcombine.high %v1386, %v1402
        %v1422 = vunpack.c.l.s4 1934713408
        %v1423 = vunpack.c.0.s8 %v1422
        %v1424 = vlaneseq
        %v1425 = vshrl.u32 %v1424, 7
        %v1426 = vsub.s32 %v1423, %v1425
        %v1427 = vrot.slane %v1419, %v1426
        %v1429 = vunpack.c.l.s4 1934713408
        %v1430 = vunpack.c.0.s8 %v1429
        %v1431 = vlaneseq
        %v1432 = vshrl.u32 %v1431, 7
        %v1433 = vsub.s32 %v1430, %v1432
        %v1434 = vrot.slane %v1420, %v1433
        %v1435 = vcombine.high %v1411, 0.0
        %v1436 = vcombine.high %v1418, 0.0
        %v1437 = vcombine.high %v1427, 0.0
        %v1438 = vcombine.high %v1434, 0.0
        %v1439 = vcombine.low %v762, %v1362
        %v1440 = vcombine.high %v762, %v1362
        %v1442 = vunpack.c.l.s4 1983009808
        %v1443 = vunpack.c.0.s8 %v1442
        %v1444 = vlaneseq
        %v1445 = vshrl.u32 %v1444, 7
        %v1446 = vsub.s32 %v1443, %v1445
        %v1447 = vrot.slane %v1439, %v1446
        %v1449 = vunpack.c.l.s4 1983009808
        %v1450 = vunpack.c.0.s8 %v1449
        %v1451 = vlaneseq
        %v1452 = vshrl.u32 %v1451, 7
        %v1453 = vsub.s32 %v1450, %v1452
        %v1454 = vrot.slane %v1440, %v1453
        %v1455 = vcombine.low %v1356, %v1368
        %v1456 = vcombine.high %v1356, %v1368
        %v1458 = vunpack.c.l.s4 1983009808
        %v1459 = vunpack.c.0.s8 %v1458
        %v1460 = vlaneseq
        %v1461 = vshrl.u32 %v1460, 7
        %v1462 = vsub.s32 %v1459, %v1461
        %v1463 = vrot.slane %v1455, %v1462
        %v1465 = vunpack.c.l.s4 1983009808
        %v1466 = vunpack.c.0.s8 %v1465
        %v1467 = vlaneseq
        %v1468 = vshrl.u32 %v1467, 7
        %v1469 = vsub.s32 %v1466, %v1468
        %v1470 = vrot.slane %v1456, %v1469
        %v1471 = vcombine.low %v1447, %v1463
        %v1472 = vcombine.high %v1447, %v1463
        %v1474 = vunpack.c.l.s4 1934713408
        %v1475 = vunpack.c.0.s8 %v1474
        %v1476 = vlaneseq
        %v1477 = vshrl.u32 %v1476, 7
        %v1478 = vsub.s32 %v1475, %v1477
        %v1479 = vrot.slane %v1471, %v1478
        %v1481 = vunpack.c.l.s4 1934713408
        %v1482 = vunpack.c.0.s8 %v1481
        %v1483 = vlaneseq
        %v1484 = vshrl.u32 %v1483, 7
        %v1485 = vsub.s32 %v1482, %v1484
        %v1486 = vrot.slane %v1472, %v1485
        %v1487 = vcombine.low %v1454, %v1470
        %v1488 = vcombine.high %v1454, %v1470
        %v1490 = vunpack.c.l.s4 1934713408
        %v1491 = vunpack.c.0.s8 %v1490
        %v1492 = vlaneseq
        %v1493 = vshrl.u32 %v1492, 7
        %v1494 = vsub.s32 %v1491, %v1493
        %v1495 = vrot.slane %v1487, %v1494
        %v1497 = vunpack.c.l.s4 1934713408
        %v1498 = vunpack.c.0.s8 %v1497
        %v1499 = vlaneseq
        %v1500 = vshrl.u32 %v1499, 7
        %v1501 = vsub.s32 %v1498, %v1500
        %v1502 = vrot.slane %v1488, %v1501
        %v1503 = vcombine.high %v1479, 0.0
        %v1504 = vcombine.high %v1486, 0.0
        %v1505 = vcombine.high %v1495, 0.0
        %v1506 = vcombine.high %v1502, 0.0
        %v1507 = vcombine.low %v1411, %v1418
        %v1509 = vunpack.c.l.s4 1983009808
        %v1510 = vunpack.c.0.s8 %v1509
        %v1511 = vlaneseq
        %v1512 = vshrl.u32 %v1511, 7
        %v1513 = vsub.s32 %v1510, %v1512
        %v1514 = vrot.slane %v1507, %v1513
        %v1515 = vcombine.low %v1435, %v1436
        %v1517 = vunpack.c.l.s4 1983009808
        %v1518 = vunpack.c.0.s8 %v1517
        %v1519 = vlaneseq
        %v1520 = vshrl.u32 %v1519, 7
        %v1521 = vsub.s32 %v1518, %v1520
        %v1522 = vrot.slane %v1515, %v1521
        %v1523 = vcombine.low %v1427, %v1434
        %v1525 = vunpack.c.l.s4 1983009808
        %v1526 = vunpack.c.0.s8 %v1525
        %v1527 = vlaneseq
        %v1528 = vshrl.u32 %v1527, 7
        %v1529 = vsub.s32 %v1526, %v1528
        %v1530 = vrot.slane %v1523, %v1529
        %v1531 = vcombine.low %v1437, %v1438
        %v1533 = vunpack.c.l.s4 1983009808
        %v1534 = vunpack.c.0.s8 %v1533
        %v1535 = vlaneseq
        %v1536 = vshrl.u32 %v1535, 7
        %v1537 = vsub.s32 %v1534, %v1536
        %v1538 = vrot.slane %v1531, %v1537
        %v1539 = vcombine.low %v1514, %v1522
        %v1540 = vcombine.high %v1514, %v1522
        %v1542 = vunpack.c.l.s4 1934713408
        %v1543 = vunpack.c.0.s8 %v1542
        %v1544 = vlaneseq
        %v1545 = vshrl.u32 %v1544, 7
        %v1546 = vsub.s32 %v1543, %v1545
        %v1547 = vrot.slane %v1539, %v1546
        %v1549 = vunpack.c.l.s4 1934713408
        %v1550 = vunpack.c.0.s8 %v1549
        %v1551 = vlaneseq
        %v1552 = vshrl.u32 %v1551, 7
        %v1553 = vsub.s32 %v1550, %v1552
        %v1554 = vrot.slane %v1540, %v1553
        %v1555 = vcombine.low %v1530, %v1538
        %v1556 = vcombine.high %v1530, %v1538
        %v1558 = vunpack.c.l.s4 1934713408
        %v1559 = vunpack.c.0.s8 %v1558
        %v1560 = vlaneseq
        %v1561 = vshrl.u32 %v1560, 7
        %v1562 = vsub.s32 %v1559, %v1561
        %v1563 = vrot.slane %v1555, %v1562
        %v1565 = vunpack.c.l.s4 1934713408
        %v1566 = vunpack.c.0.s8 %v1565
        %v1567 = vlaneseq
        %v1568 = vshrl.u32 %v1567, 7
        %v1569 = vsub.s32 %v1566, %v1568
        %v1570 = vrot.slane %v1556, %v1569
        %v1571 = vcombine.low %v1547, %v1563
        %v1572 = vcombine.high %v1547, %v1563
        %v1573 = vcombine.low %v1554, %v1570
        %v1574 = vcombine.high %v1554, %v1570
        %v1575 = vcombine.low %v1479, %v1486
        %v1577 = vunpack.c.l.s4 1983009808
        %v1578 = vunpack.c.0.s8 %v1577
        %v1579 = vlaneseq
        %v1580 = vshrl.u32 %v1579, 7
        %v1581 = vsub.s32 %v1578, %v1580
        %v1582 = vrot.slane %v1575, %v1581
        %v1583 = vcombine.low %v1503, %v1504
        %v1585 = vunpack.c.l.s4 1983009808
        %v1586 = vunpack.c.0.s8 %v1585
        %v1587 = vlaneseq
        %v1588 = vshrl.u32 %v1587, 7
        %v1589 = vsub.s32 %v1586, %v1588
        %v1590 = vrot.slane %v1583, %v1589
        %v1591 = vcombine.low %v1495, %v1502
        %v1593 = vunpack.c.l.s4 1983009808
        %v1594 = vunpack.c.0.s8 %v1593
        %v1595 = vlaneseq
        %v1596 = vshrl.u32 %v1595, 7
        %v1597 = vsub.s32 %v1594, %v1596
        %v1598 = vrot.slane %v1591, %v1597
        %v1599 = vcombine.low %v1505, %v1506
        %v1601 = vunpack.c.l.s4 1983009808
        %v1602 = vunpack.c.0.s8 %v1601
        %v1603 = vlaneseq
        %v1604 = vshrl.u32 %v1603, 7
        %v1605 = vsub.s32 %v1602, %v1604
        %v1606 = vrot.slane %v1599, %v1605
        %v1607 = vcombine.low %v1582, %v1590
        %v1608 = vcombine.high %v1582, %v1590
        %v1610 = vunpack.c.l.s4 1934713408
        %v1611 = vunpack.c.0.s8 %v1610
        %v1612 = vlaneseq
        %v1613 = vshrl.u32 %v1612, 7
        %v1614 = vsub.s32 %v1611, %v1613
        %v1615 = vrot.slane %v1607, %v1614
        %v1617 = vunpack.c.l.s4 1934713408
        %v1618 = vunpack.c.0.s8 %v1617
        %v1619 = vlaneseq
        %v1620 = vshrl.u32 %v1619, 7
        %v1621 = vsub.s32 %v1618, %v1620
        %v1622 = vrot.slane %v1608, %v1621
        %v1623 = vcombine.low %v1598, %v1606
        %v1624 = vcombine.high %v1598, %v1606
        %v1626 = vunpack.c.l.s4 1934713408
        %v1627 = vunpack.c.0.s8 %v1626
        %v1628 = vlaneseq
        %v1629 = vshrl.u32 %v1628, 7
        %v1630 = vsub.s32 %v1627, %v1629
        %v1631 = vrot.slane %v1623, %v1630
        %v1633 = vunpack.c.l.s4 1934713408
        %v1634 = vunpack.c.0.s8 %v1633
        %v1635 = vlaneseq
        %v1636 = vshrl.u32 %v1635, 7
        %v1637 = vsub.s32 %v1634, %v1636
        %v1638 = vrot.slane %v1624, %v1637
        %v1639 = vcombine.low %v1615, %v1631
        %v1640 = vcombine.high %v1615, %v1631
        %v1641 = vcombine.low %v1622, %v1638
        %v1642 = vcombine.high %v1622, %v1638
        %v1643 = vpack.c.bf16 %v1639, %v1571
        %v1644 = vpack.c.bf16 %v1640, %v1572
        %v1645 = vpack.c.bf16 %v1641, %v1573
        %v1646 = vpack.c.bf16 %v1642, %v1574
        %v1647 = vld [vmem:[%s467] sm:$0xff]
        %v1648 = vld [vmem:[%s467 + $0x8] sm:$0xff]
        %v1649 = vld [vmem:[%s473] sm:$0xff]
        %v1650 = vld [vmem:[%s473 + $0x8] sm:$0xff]
        %v1651 = vmul.f32 %v987, %v1647
        %v1652 = vmul.f32 %v1055, %v1648
        %v1653 = vmul.f32 %v988, %v1647
        %v1654 = vmul.f32 %v1056, %v1648
        %v1655 = vmul.f32 %v989, %v1647
        %v1656 = vmul.f32 %v1057, %v1648
        %v1657 = vmul.f32 %v990, %v1647
        %v1658 = vmul.f32 %v1058, %v1648
        %1661 = vrot.lane.b32.xlu0 %v1649, 8
        %v1662 = vpop.permute.xlu0 %1661
        %1663 = vrot.lane.b32.xlu0 %v1650, 8
        %v1664 = vpop.permute.xlu0 %1663
        %v1667 = vmul.f32 %v987, %v1662
        %v1668 = vmul.f32 %v1055, %v1664
        %v1669 = vmul.f32 %v988, %v1662
        %v1670 = vmul.f32 %v1056, %v1664
        %v1671 = vmul.f32 %v989, %v1662
        %v1672 = vmul.f32 %v1057, %v1664
        %v1673 = vmul.f32 %v990, %v1662
        %v1674 = vmul.f32 %v1058, %v1664
        %1683 = vrot.lane.b32.xlu0 %v1667, 120
        %v1684 = vpop.permute.xlu0 %1683
        %1685 = vrot.lane.b32.xlu0 %v1668, 120
        %v1686 = vpop.permute.xlu0 %1685
        %1687 = vrot.lane.b32.xlu0 %v1669, 120
        %v1688 = vpop.permute.xlu0 %1687
        %1689 = vrot.lane.b32.xlu0 %v1670, 120
        %v1690 = vpop.permute.xlu0 %1689
        %1691 = vrot.lane.b32.xlu0 %v1671, 120
        %v1692 = vpop.permute.xlu0 %1691
        %1693 = vrot.lane.b32.xlu0 %v1672, 120
        %v1694 = vpop.permute.xlu0 %1693
        %1695 = vrot.lane.b32.xlu0 %v1673, 120
        %v1696 = vpop.permute.xlu0 %1695
        %1697 = vrot.lane.b32.xlu0 %v1674, 120
        %v1698 = vpop.permute.xlu0 %1697
        %v1707 = vsub.f32 %v1651, %v1684
        %v1708 = vsub.f32 %v1652, %v1686
        %v1709 = vsub.f32 %v1653, %v1688
        %v1710 = vsub.f32 %v1654, %v1690
        %v1711 = vsub.f32 %v1655, %v1692
        %v1712 = vsub.f32 %v1656, %v1694
        %v1713 = vsub.f32 %v1657, %v1696
        %v1714 = vsub.f32 %v1658, %v1698
        %1717 = vrot.lane.b32.xlu0 %v1647, 8
        %v1718 = vpop.permute.xlu0 %1717
        %1719 = vrot.lane.b32.xlu0 %v1648, 8
        %v1720 = vpop.permute.xlu0 %1719
        %v1723 = vmul.f32 %v987, %v1718
        %v1724 = vmul.f32 %v1055, %v1720
        %v1725 = vmul.f32 %v988, %v1718
        %v1726 = vmul.f32 %v1056, %v1720
        %v1727 = vmul.f32 %v989, %v1718
        %v1728 = vmul.f32 %v1057, %v1720
        %v1729 = vmul.f32 %v990, %v1718
        %v1730 = vmul.f32 %v1058, %v1720
        %v1731 = vmul.f32 %v987, %v1649
        %v1732 = vmul.f32 %v1055, %v1650
        %v1733 = vmul.f32 %v988, %v1649
        %v1734 = vmul.f32 %v1056, %v1650
        %v1735 = vmul.f32 %v989, %v1649
        %v1736 = vmul.f32 %v1057, %v1650
        %v1737 = vmul.f32 %v990, %v1649
        %v1738 = vmul.f32 %v1058, %v1650
        %1747 = vrot.lane.b32.xlu0 %v1731, 8
        %v1748 = vpop.permute.xlu0 %1747
        %1749 = vrot.lane.b32.xlu0 %v1732, 8
        %v1750 = vpop.permute.xlu0 %1749
        %1751 = vrot.lane.b32.xlu0 %v1733, 8
        %v1752 = vpop.permute.xlu0 %1751
        %1753 = vrot.lane.b32.xlu0 %v1734, 8
        %v1754 = vpop.permute.xlu0 %1753
        %1755 = vrot.lane.b32.xlu0 %v1735, 8
        %v1756 = vpop.permute.xlu0 %1755
        %1757 = vrot.lane.b32.xlu0 %v1736, 8
        %v1758 = vpop.permute.xlu0 %1757
        %1759 = vrot.lane.b32.xlu0 %v1737, 8
        %v1760 = vpop.permute.xlu0 %1759
        %1761 = vrot.lane.b32.xlu0 %v1738, 8
        %v1762 = vpop.permute.xlu0 %1761
        %v1771 = vadd.f32 %v1723, %v1748
        %v1772 = vadd.f32 %v1724, %v1750
        %v1773 = vadd.f32 %v1725, %v1752
        %v1774 = vadd.f32 %v1726, %v1754
        %v1775 = vadd.f32 %v1727, %v1756
        %v1776 = vadd.f32 %v1728, %v1758
        %v1777 = vadd.f32 %v1729, %v1760
        %v1778 = vadd.f32 %v1730, %v1762
        %vm1779 = vcmask 64512
        %v1780 = vsel %vm1779, %v1707, %v1771
        %v1781 = vsel %vm1779, %v1708, %v1772
        %v1782 = vsel %vm1779, %v1709, %v1773
        %v1783 = vsel %vm1779, %v1710, %v1774
        %v1784 = vsel %vm1779, %v1711, %v1775
        %v1785 = vsel %vm1779, %v1712, %v1776
        %v1786 = vsel %vm1779, %v1713, %v1777
        %v1787 = vsel %vm1779, %v1714, %v1778
        %vm1788 = vcmask 130048
        %v1789 = vsel %vm1788, %v1780, %v987
        %v1790 = vsel %vm1788, %v1781, %v1055
        %v1791 = vsel %vm1788, %v1782, %v988
        %v1792 = vsel %vm1788, %v1783, %v1056
        %v1793 = vsel %vm1788, %v1784, %v989
        %v1794 = vsel %vm1788, %v1785, %v1057
        %v1795 = vsel %vm1788, %v1786, %v990
        %v1796 = vsel %vm1788, %v1787, %v1058
        %v1797 = vpack.c.bf16 %v1790, %v1789
        %v1798 = vpack.c.bf16 %v1792, %v1791
        %v1799 = vpack.c.bf16 %v1794, %v1793
        %v1800 = vpack.c.bf16 %v1796, %v1795
        %v1801 = vmul.f32 %v1279, %v1647
        %v1802 = vmul.f32 %v1347, %v1648
        %v1803 = vmul.f32 %v1280, %v1647
        %v1804 = vmul.f32 %v1348, %v1648
        %v1805 = vmul.f32 %v1281, %v1647
        %v1806 = vmul.f32 %v1349, %v1648
        %v1807 = vmul.f32 %v1282, %v1647
        %v1808 = vmul.f32 %v1350, %v1648
        %v1809 = vmul.f32 %v1279, %v1662
        %v1810 = vmul.f32 %v1347, %v1664
        %v1811 = vmul.f32 %v1280, %v1662
        %v1812 = vmul.f32 %v1348, %v1664
        %v1813 = vmul.f32 %v1281, %v1662
        %v1814 = vmul.f32 %v1349, %v1664
        %v1815 = vmul.f32 %v1282, %v1662
        %v1816 = vmul.f32 %v1350, %v1664
        %1825 = vrot.lane.b32.xlu0 %v1809, 120
        %v1826 = vpop.permute.xlu0 %1825
        %1827 = vrot.lane.b32.xlu0 %v1810, 120
        %v1828 = vpop.permute.xlu0 %1827
        %1829 = vrot.lane.b32.xlu0 %v1811, 120
        %v1830 = vpop.permute.xlu0 %1829
        %1831 = vrot.lane.b32.xlu0 %v1812, 120
        %v1832 = vpop.permute.xlu0 %1831
        %1833 = vrot.lane.b32.xlu0 %v1813, 120
        %v1834 = vpop.permute.xlu0 %1833
        %1835 = vrot.lane.b32.xlu0 %v1814, 120
        %v1836 = vpop.permute.xlu0 %1835
        %1837 = vrot.lane.b32.xlu0 %v1815, 120
        %v1838 = vpop.permute.xlu0 %1837
        %1839 = vrot.lane.b32.xlu0 %v1816, 120
        %v1840 = vpop.permute.xlu0 %1839
        %v1849 = vsub.f32 %v1801, %v1826
        %v1850 = vsub.f32 %v1802, %v1828
        %v1851 = vsub.f32 %v1803, %v1830
        %v1852 = vsub.f32 %v1804, %v1832
        %v1853 = vsub.f32 %v1805, %v1834
        %v1854 = vsub.f32 %v1806, %v1836
        %v1855 = vsub.f32 %v1807, %v1838
        %v1856 = vsub.f32 %v1808, %v1840
        %v1857 = vmul.f32 %v1279, %v1718
        %v1858 = vmul.f32 %v1347, %v1720
        %v1859 = vmul.f32 %v1280, %v1718
        %v1860 = vmul.f32 %v1348, %v1720
        %v1861 = vmul.f32 %v1281, %v1718
        %v1862 = vmul.f32 %v1349, %v1720
        %v1863 = vmul.f32 %v1282, %v1718
        %v1864 = vmul.f32 %v1350, %v1720
        %v1865 = vmul.f32 %v1279, %v1649
        %v1866 = vmul.f32 %v1347, %v1650
        %v1867 = vmul.f32 %v1280, %v1649
        %v1868 = vmul.f32 %v1348, %v1650
        %v1869 = vmul.f32 %v1281, %v1649
        %v1870 = vmul.f32 %v1349, %v1650
        %v1871 = vmul.f32 %v1282, %v1649
        %v1872 = vmul.f32 %v1350, %v1650
        %1881 = vrot.lane.b32.xlu0 %v1865, 8
        %v1882 = vpop.permute.xlu0 %1881
        %1883 = vrot.lane.b32.xlu0 %v1866, 8
        %v1884 = vpop.permute.xlu0 %1883
        %1885 = vrot.lane.b32.xlu0 %v1867, 8
        %v1886 = vpop.permute.xlu0 %1885
        %1887 = vrot.lane.b32.xlu0 %v1868, 8
        %v1888 = vpop.permute.xlu0 %1887
        %1889 = vrot.lane.b32.xlu0 %v1869, 8
        %v1890 = vpop.permute.xlu0 %1889
        %1891 = vrot.lane.b32.xlu0 %v1870, 8
        %v1892 = vpop.permute.xlu0 %1891
        %1893 = vrot.lane.b32.xlu0 %v1871, 8
        %v1894 = vpop.permute.xlu0 %1893
        %1895 = vrot.lane.b32.xlu0 %v1872, 8
        %v1896 = vpop.permute.xlu0 %1895
        %v1905 = vadd.f32 %v1857, %v1882
        %v1906 = vadd.f32 %v1858, %v1884
        %v1907 = vadd.f32 %v1859, %v1886
        %v1908 = vadd.f32 %v1860, %v1888
        %v1909 = vadd.f32 %v1861, %v1890
        %v1910 = vadd.f32 %v1862, %v1892
        %v1911 = vadd.f32 %v1863, %v1894
        %v1912 = vadd.f32 %v1864, %v1896
        %v1913 = vsel %vm1779, %v1849, %v1905
        %v1914 = vsel %vm1779, %v1850, %v1906
        %v1915 = vsel %vm1779, %v1851, %v1907
        %v1916 = vsel %vm1779, %v1852, %v1908
        %v1917 = vsel %vm1779, %v1853, %v1909
        %v1918 = vsel %vm1779, %v1854, %v1910
        %v1919 = vsel %vm1779, %v1855, %v1911
        %v1920 = vsel %vm1779, %v1856, %v1912
        %v1921 = vsel %vm1788, %v1913, %v1279
        %v1922 = vsel %vm1788, %v1914, %v1347
        %v1923 = vsel %vm1788, %v1915, %v1280
        %v1924 = vsel %vm1788, %v1916, %v1348
        %v1925 = vsel %vm1788, %v1917, %v1281
        %v1926 = vsel %vm1788, %v1918, %v1349
        %v1927 = vsel %vm1788, %v1919, %v1282
        %v1928 = vsel %vm1788, %v1920, %v1350
        %v1929 = vpack.c.bf16 %v1922, %v1921
        %v1930 = vpack.c.bf16 %v1924, %v1923
        %v1931 = vpack.c.bf16 %v1926, %v1925
        %v1932 = vpack.c.bf16 %v1928, %v1927
        %vm1933 = vcmask 261120
        %v1935 = vsel %vm1933, %v1797, 0
        %v1938 = vsel %vm1933, %v1929, 0
        %1940 = vmatprep.subr.bf16.mxu0 0
        %1941 = vmatpush1.bf16.xpose.msra.mxu0 %v1938
        %1942 = vmatprep.subr.bf16.mxu0 0
        %1943 = vmatpush1.bf16.xpose.msra.mxu0 0
        %1944 = vmatprep.subr.bf16.mxu0 0
        %1945 = vmatpush1.bf16.xpose.msra.mxu0 0
        %1946 = vmatprep.subr.bf16.mxu0 0
        %1947 = vmatpush1.bf16.xpose.msra.mxu0 0
        %1948 = vmatprep.subr.bf16.mxu0 0
        %1949 = vmatpush1.bf16.xpose.msra.mxu0 0
        %1950 = vmatprep.subr.bf16.mxu0 0
        %1951 = vmatpush1.bf16.xpose.msra.mxu0 0
        %1952 = vmatprep.subr.bf16.mxu0 0
        %1953 = vmatpush1.bf16.xpose.msra.mxu0 0
        %1954 = vmatprep.subr.bf16.mxu0 0
        %1955 = vmatpush1.bf16.xpose.msra.mxu0 0
        %1956 = vmatprep.subr.bf16.mxu0 0
        %1957 = vmatpush1.bf16.xpose.msra.mxu0 0
        %1958 = vmatprep.subr.bf16.mxu0 0
        %1959 = vmatpush1.bf16.xpose.msra.mxu0 0
        %1960 = vmatprep.subr.bf16.mxu0 0
        %1961 = vmatpush1.bf16.xpose.msra.mxu0 0
        %1962 = vmatprep.subr.bf16.mxu0 0
        %1963 = vmatpush1.bf16.xpose.msra.mxu0 0
        %1964 = vmatprep.subr.bf16.mxu0 0
        %1965 = vmatpush1.bf16.xpose.msra.mxu0 0
        %1966 = vmatprep.subr.bf16.mxu0 0
        %1967 = vmatpush1.bf16.xpose.msra.mxu0 0
        %1968 = vmatprep.subr.bf16.mxu0 0
        %1969 = vmatpush1.bf16.xpose.msra.mxu0 0
        %1970 = vmatprep.subr.bf16.mxu0 0
        %1971 = vmatpush1.bf16.xpose.msra.mxu0 0
        %1972 = vmatprep.mubr.bf16.mxu0 0
        %1973 = vmatmul.mubr.bf16.gmra.mrb[0].mxu0 %v1935
        %v1974 = vpop.f32.mrb[0].mxu0
        %v1975 = vadd.f32 0.0, %v1974
        %v1976 = vpop.f32.mrb[0].mxu0
        %v1977 = vpop.f32.mrb[0].mxu0
        %v1978 = vadd.f32 0.0, %v1977
        %v1979 = vpop.f32.mrb[0].mxu0
        %1980 = vdwg.mxu0
        %v1982 = vsel %vm1933, %v1798, 0
        %v1985 = vsel %vm1933, %v1930, 0
        %1987 = vmatprep.subr.bf16.mxu0 0
        %1988 = vmatpush1.bf16.xpose.msra.mxu0 %v1985
        %1989 = vmatprep.subr.bf16.mxu0 0
        %1990 = vmatpush1.bf16.xpose.msra.mxu0 0
        %1991 = vmatprep.subr.bf16.mxu0 0
        %1992 = vmatpush1.bf16.xpose.msra.mxu0 0
        %1993 = vmatprep.subr.bf16.mxu0 0
        %1994 = vmatpush1.bf16.xpose.msra.mxu0 0
        %1995 = vmatprep.subr.bf16.mxu0 0
        %1996 = vmatpush1.bf16.xpose.msra.mxu0 0
        %1997 = vmatprep.subr.bf16.mxu0 0
        %1998 = vmatpush1.bf16.xpose.msra.mxu0 0
        %1999 = vmatprep.subr.bf16.mxu0 0
        %2000 = vmatpush1.bf16.xpose.msra.mxu0 0
        %2001 = vmatprep.subr.bf16.mxu0 0
        %2002 = vmatpush1.bf16.xpose.msra.mxu0 0
        %2003 = vmatprep.subr.bf16.mxu0 0
        %2004 = vmatpush1.bf16.xpose.msra.mxu0 0
        %2005 = vmatprep.subr.bf16.mxu0 0
        %2006 = vmatpush1.bf16.xpose.msra.mxu0 0
        %2007 = vmatprep.subr.bf16.mxu0 0
        %2008 = vmatpush1.bf16.xpose.msra.mxu0 0
        %2009 = vmatprep.subr.bf16.mxu0 0
        %2010 = vmatpush1.bf16.xpose.msra.mxu0 0
        %2011 = vmatprep.subr.bf16.mxu0 0
        %2012 = vmatpush1.bf16.xpose.msra.mxu0 0
        %2013 = vmatprep.subr.bf16.mxu0 0
        %2014 = vmatpush1.bf16.xpose.msra.mxu0 0
        %2015 = vmatprep.subr.bf16.mxu0 0
        %2016 = vmatpush1.bf16.xpose.msra.mxu0 0
        %2017 = vmatprep.subr.bf16.mxu0 0
        %2018 = vmatpush1.bf16.xpose.msra.mxu0 0
        %2019 = vmatprep.mubr.bf16.mxu0 0
        %2020 = vmatmul.mubr.bf16.gmra.mrb[0].mxu0 %v1982
        %v2021 = vpop.f32.mrb[0].mxu0
        %v2022 = vadd.f32 0.0, %v2021
        %v2023 = vpop.f32.mrb[0].mxu0
        %v2024 = vpop.f32.mrb[0].mxu0
        %v2025 = vadd.f32 0.0, %v2024
        %v2026 = vpop.f32.mrb[0].mxu0
        %2027 = vdwg.mxu0
        %v2029 = vsel %vm1933, %v1799, 0
        %v2032 = vsel %vm1933, %v1931, 0
        %2034 = vmatprep.subr.bf16.mxu0 0
        %2035 = vmatpush1.bf16.xpose.msra.mxu0 %v2032
        %2036 = vmatprep.subr.bf16.mxu0 0
        %2037 = vmatpush1.bf16.xpose.msra.mxu0 0
        %2038 = vmatprep.subr.bf16.mxu0 0
        %2039 = vmatpush1.bf16.xpose.msra.mxu0 0
        %2040 = vmatprep.subr.bf16.mxu0 0
        %2041 = vmatpush1.bf16.xpose.msra.mxu0 0
        %2042 = vmatprep.subr.bf16.mxu0 0
        %2043 = vmatpush1.bf16.xpose.msra.mxu0 0
        %2044 = vmatprep.subr.bf16.mxu0 0
        %2045 = vmatpush1.bf16.xpose.msra.mxu0 0
        %2046 = vmatprep.subr.bf16.mxu0 0
        %2047 = vmatpush1.bf16.xpose.msra.mxu0 0
        %2048 = vmatprep.subr.bf16.mxu0 0
        %2049 = vmatpush1.bf16.xpose.msra.mxu0 0
        %2050 = vmatprep.subr.bf16.mxu0 0
        %2051 = vmatpush1.bf16.xpose.msra.mxu0 0
        %2052 = vmatprep.subr.bf16.mxu0 0
        %2053 = vmatpush1.bf16.xpose.msra.mxu0 0
        %2054 = vmatprep.subr.bf16.mxu0 0
        %2055 = vmatpush1.bf16.xpose.msra.mxu0 0
        %2056 = vmatprep.subr.bf16.mxu0 0
        %2057 = vmatpush1.bf16.xpose.msra.mxu0 0
        %2058 = vmatprep.subr.bf16.mxu0 0
        %2059 = vmatpush1.bf16.xpose.msra.mxu0 0
        %2060 = vmatprep.subr.bf16.mxu0 0
        %2061 = vmatpush1.bf16.xpose.msra.mxu0 0
        %2062 = vmatprep.subr.bf16.mxu0 0
        %2063 = vmatpush1.bf16.xpose.msra.mxu0 0
        %2064 = vmatprep.subr.bf16.mxu0 0
        %2065 = vmatpush1.bf16.xpose.msra.mxu0 0
        %2066 = vmatprep.mubr.bf16.mxu0 0
        %2067 = vmatmul.mubr.bf16.gmra.mrb[0].mxu0 %v2029
        %v2068 = vpop.f32.mrb[0].mxu0
        %v2069 = vadd.f32 0.0, %v2068
        %v2070 = vpop.f32.mrb[0].mxu0
        %v2071 = vpop.f32.mrb[0].mxu0
        %v2072 = vadd.f32 0.0, %v2071
        %v2073 = vpop.f32.mrb[0].mxu0
        %2074 = vdwg.mxu0
        %v2076 = vsel %vm1933, %v1800, 0
        %v2079 = vsel %vm1933, %v1932, 0
        %2081 = vmatprep.subr.bf16.mxu0 0
        %2082 = vmatpush1.bf16.xpose.msra.mxu0 %v2079
        %2083 = vmatprep.subr.bf16.mxu0 0
        %2084 = vmatpush1.bf16.xpose.msra.mxu0 0
        %2085 = vmatprep.subr.bf16.mxu0 0
        %2086 = vmatpush1.bf16.xpose.msra.mxu0 0
        %2087 = vmatprep.subr.bf16.mxu0 0
        %2088 = vmatpush1.bf16.xpose.msra.mxu0 0
        %2089 = vmatprep.subr.bf16.mxu0 0
        %2090 = vmatpush1.bf16.xpose.msra.mxu0 0
        %2091 = vmatprep.subr.bf16.mxu0 0
        %2092 = vmatpush1.bf16.xpose.msra.mxu0 0
        %2093 = vmatprep.subr.bf16.mxu0 0
        %2094 = vmatpush1.bf16.xpose.msra.mxu0 0
        %2095 = vmatprep.subr.bf16.mxu0 0
        %2096 = vmatpush1.bf16.xpose.msra.mxu0 0
        %2097 = vmatprep.subr.bf16.mxu0 0
        %2098 = vmatpush1.bf16.xpose.msra.mxu0 0
        %2099 = vmatprep.subr.bf16.mxu0 0
        %2100 = vmatpush1.bf16.xpose.msra.mxu0 0
        %2101 = vmatprep.subr.bf16.mxu0 0
        %2102 = vmatpush1.bf16.xpose.msra.mxu0 0
        %2103 = vmatprep.subr.bf16.mxu0 0
        %2104 = vmatpush1.bf16.xpose.msra.mxu0 0
        %2105 = vmatprep.subr.bf16.mxu0 0
        %2106 = vmatpush1.bf16.xpose.msra.mxu0 0
        %2107 = vmatprep.subr.bf16.mxu0 0
        %2108 = vmatpush1.bf16.xpose.msra.mxu0 0
        %2109 = vmatprep.subr.bf16.mxu0 0
        %2110 = vmatpush1.bf16.xpose.msra.mxu0 0
        %2111 = vmatprep.subr.bf16.mxu0 0
        %2112 = vmatpush1.bf16.xpose.msra.mxu0 0
        %2113 = vmatprep.mubr.bf16.mxu0 0
        %2114 = vmatmul.mubr.bf16.gmra.mrb[0].mxu0 %v2076
        %v2115 = vpop.f32.mrb[0].mxu0
        %v2116 = vadd.f32 0.0, %v2115
        %v2117 = vpop.f32.mrb[0].mxu0
        %v2118 = vpop.f32.mrb[0].mxu0
        %v2119 = vadd.f32 0.0, %v2118
        %v2120 = vpop.f32.mrb[0].mxu0
        %2121 = vdwg.mxu0
        %v2122 = vlaneseq
        %v2123 = vshrl.u32 %v2122, 7
        %v2124 = vadd.s32 %v2123, 8
        %v2125 = vlaneseq
        %v2126 = vand.u32 %v2125, 127
        %vm2127 = vcmp.le.s32.totalorder %v2126, %v2123
        %vm2128 = vcmp.le.s32.totalorder %v2126, %v2124
        %v2129 = vsel %vm2127, 1, 0
        %v2130 = vsel %vm2128, 1, 0
        %vm2131 = vcmp.eq.s32.totalorder %v2129, 1
        %vm2132 = vcmp.eq.s32.totalorder %v2130, 1
        %v2133 = vsel %vm2131, %v1975, -1e+30
        %v2134 = vsel %vm2132, %v1978, -1e+30
        %v2135 = vsel %vm2131, %v2022, -1e+30
        %v2136 = vsel %vm2132, %v2025, -1e+30
        %v2137 = vsel %vm2131, %v2069, -1e+30
        %v2138 = vsel %vm2132, %v2072, -1e+30
        %v2139 = vsel %vm2131, %v2116, -1e+30
        %v2140 = vsel %vm2132, %v2119, -1e+30
        %v2141 = vsel %vm1788, %v2133, -inf
        %2142 = vmax.xlane.f32.xlu0 %v2141
        %v2143 = vpop.xlane.xlu0 %2142
        %v2144 = vsel %vm1788, %v2134, -inf
        %2145 = vmax.xlane.f32.xlu0 %v2144
        %v2146 = vpop.xlane.xlu0 %2145
        %v2147 = vsel %vm1788, %v2135, -inf
        %2148 = vmax.xlane.f32.xlu0 %v2147
        %v2149 = vpop.xlane.xlu0 %2148
        %v2150 = vsel %vm1788, %v2136, -inf
        %2151 = vmax.xlane.f32.xlu0 %v2150
        %v2152 = vpop.xlane.xlu0 %2151
        %v2153 = vsel %vm1788, %v2137, -inf
        %2154 = vmax.xlane.f32.xlu0 %v2153
        %v2155 = vpop.xlane.xlu0 %2154
        %v2156 = vsel %vm1788, %v2138, -inf
        %2157 = vmax.xlane.f32.xlu0 %v2156
        %v2158 = vpop.xlane.xlu0 %2157
        %v2159 = vsel %vm1788, %v2139, -inf
        %2160 = vmax.xlane.f32.xlu0 %v2159
        %v2161 = vpop.xlane.xlu0 %2160
        %v2162 = vsel %vm1788, %v2140, -inf
        %2163 = vmax.xlane.f32.xlu0 %v2162
        %v2164 = vpop.xlane.xlu0 %2163
        %v2165 = vsub.f32 %v2133, %v2143
        %v2166 = vsub.f32 %v2134, %v2146
        %v2167 = vsub.f32 %v2135, %v2149
        %v2168 = vsub.f32 %v2136, %v2152
        %v2169 = vsub.f32 %v2137, %v2155
        %v2170 = vsub.f32 %v2138, %v2158
        %v2171 = vsub.f32 %v2139, %v2161
        %v2172 = vsub.f32 %v2140, %v2164
        %v2173 = vmul.f32 %v2165, 1.442695
        %v2174 = vpow.pop %v2173
        %v2175 = vmul.f32 %v2166, 1.442695
        %v2176 = vpow.pop %v2175
        %v2177 = vmul.f32 %v2167, 1.442695
        %v2178 = vpow.pop %v2177
        %v2179 = vmul.f32 %v2168, 1.442695
        %v2180 = vpow.pop %v2179
        %v2181 = vmul.f32 %v2169, 1.442695
        %v2182 = vpow.pop %v2181
        %v2183 = vmul.f32 %v2170, 1.442695
        %v2184 = vpow.pop %v2183
        %v2185 = vmul.f32 %v2171, 1.442695
        %v2186 = vpow.pop %v2185
        %v2187 = vmul.f32 %v2172, 1.442695
        %v2188 = vpow.pop %v2187
        %v2189 = vsel %vm1788, %v2174, 0.0
        %2190 = vadd.xlane.f32.xlu0 %v2189
        %v2191 = vpop.xlane.xlu0 %2190
        %v2192 = vsel %vm1788, %v2176, 0.0
        %2193 = vadd.xlane.f32.xlu0 %v2192
        %v2194 = vpop.xlane.xlu0 %2193
        %v2195 = vsel %vm1788, %v2178, 0.0
        %2196 = vadd.xlane.f32.xlu0 %v2195
        %v2197 = vpop.xlane.xlu0 %2196
        %v2198 = vsel %vm1788, %v2180, 0.0
        %2199 = vadd.xlane.f32.xlu0 %v2198
        %v2200 = vpop.xlane.xlu0 %2199
        %v2201 = vsel %vm1788, %v2182, 0.0
        %2202 = vadd.xlane.f32.xlu0 %v2201
        %v2203 = vpop.xlane.xlu0 %2202
        %v2204 = vsel %vm1788, %v2184, 0.0
        %2205 = vadd.xlane.f32.xlu0 %v2204
        %v2206 = vpop.xlane.xlu0 %2205
        %v2207 = vsel %vm1788, %v2186, 0.0
        %2208 = vadd.xlane.f32.xlu0 %v2207
        %v2209 = vpop.xlane.xlu0 %2208
        %v2210 = vsel %vm1788, %v2188, 0.0
        %2211 = vadd.xlane.f32.xlu0 %v2210
        %v2212 = vpop.xlane.xlu0 %2211
        %v2213 = vrcp.pop %v2191
        %v2214 = vrcp.pop %v2194
        %v2215 = vrcp.pop %v2197
        %v2216 = vrcp.pop %v2200
        %v2217 = vrcp.pop %v2203
        %v2218 = vrcp.pop %v2206
        %v2219 = vrcp.pop %v2209
        %v2220 = vrcp.pop %v2212
        %v2221 = vmul.f32 %v2174, %v2213
        %v2222 = vmul.f32 %v2176, %v2214
        %v2223 = vmul.f32 %v2178, %v2215
        %v2224 = vmul.f32 %v2180, %v2216
        %v2225 = vmul.f32 %v2182, %v2217
        %v2226 = vmul.f32 %v2184, %v2218
        %v2227 = vmul.f32 %v2186, %v2219
        %v2228 = vmul.f32 %v2188, %v2220
        %v2229 = vpack.c.bf16 %v2222, %v2221
        %v2230 = vpack.c.bf16 %v2224, %v2223
        %v2231 = vpack.c.bf16 %v2226, %v2225
        %v2232 = vpack.c.bf16 %v2228, %v2227
        %v2234 = vsel %vm1788, %v2229, 0
        %2236 = vmatprep.subr.bf16.mxu0 0
        %2237 = vmatpush1.bf16.msra.mxu0 %v1643
        %2238 = vmatprep.subr.bf16.mxu0 0
        %2239 = vmatpush1.bf16.msra.mxu0 0
        %2240 = vmatprep.subr.bf16.mxu0 0
        %2241 = vmatpush1.bf16.msra.mxu0 0
        %2242 = vmatprep.subr.bf16.mxu0 0
        %2243 = vmatpush1.bf16.msra.mxu0 0
        %2244 = vmatprep.subr.bf16.mxu0 0
        %2245 = vmatpush1.bf16.msra.mxu0 0
        %2246 = vmatprep.subr.bf16.mxu0 0
        %2247 = vmatpush1.bf16.msra.mxu0 0
        %2248 = vmatprep.subr.bf16.mxu0 0
        %2249 = vmatpush1.bf16.msra.mxu0 0
        %2250 = vmatprep.subr.bf16.mxu0 0
        %2251 = vmatpush1.bf16.msra.mxu0 0
        %2252 = vmatprep.subr.bf16.mxu0 0
        %2253 = vmatpush1.bf16.msra.mxu0 0
        %2254 = vmatprep.subr.bf16.mxu0 0
        %2255 = vmatpush1.bf16.msra.mxu0 0
        %2256 = vmatprep.subr.bf16.mxu0 0
        %2257 = vmatpush1.bf16.msra.mxu0 0
        %2258 = vmatprep.subr.bf16.mxu0 0
        %2259 = vmatpush1.bf16.msra.mxu0 0
        %2260 = vmatprep.subr.bf16.mxu0 0
        %2261 = vmatpush1.bf16.msra.mxu0 0
        %2262 = vmatprep.subr.bf16.mxu0 0
        %2263 = vmatpush1.bf16.msra.mxu0 0
        %2264 = vmatprep.subr.bf16.mxu0 0
        %2265 = vmatpush1.bf16.msra.mxu0 0
        %2266 = vmatprep.subr.bf16.mxu0 0
        %2267 = vmatpush1.bf16.msra.mxu0 0
        %2268 = vmatprep.mubr.bf16.mxu0 0
        %2269 = vmatmul.mubr.bf16.gmra.mrb[0].mxu0 %v2234
        %v2270 = vpop.f32.mrb[0].mxu0
        %v2271 = vadd.f32 0.0, %v2270
        %v2272 = vpop.f32.mrb[0].mxu0
        %v2273 = vpop.f32.mrb[0].mxu0
        %v2274 = vadd.f32 0.0, %v2273
        %v2275 = vpop.f32.mrb[0].mxu0
        %2276 = vdwg.mxu0
        %v2278 = vsel %vm1788, %v2230, 0
        %2280 = vmatprep.subr.bf16.mxu0 0
        %2281 = vmatpush1.bf16.msra.mxu0 %v1644
        %2282 = vmatprep.subr.bf16.mxu0 0
        %2283 = vmatpush1.bf16.msra.mxu0 0
        %2284 = vmatprep.subr.bf16.mxu0 0
        %2285 = vmatpush1.bf16.msra.mxu0 0
        %2286 = vmatprep.subr.bf16.mxu0 0
        %2287 = vmatpush1.bf16.msra.mxu0 0
        %2288 = vmatprep.subr.bf16.mxu0 0
        %2289 = vmatpush1.bf16.msra.mxu0 0
        %2290 = vmatprep.subr.bf16.mxu0 0
        %2291 = vmatpush1.bf16.msra.mxu0 0
        %2292 = vmatprep.subr.bf16.mxu0 0
        %2293 = vmatpush1.bf16.msra.mxu0 0
        %2294 = vmatprep.subr.bf16.mxu0 0
        %2295 = vmatpush1.bf16.msra.mxu0 0
        %2296 = vmatprep.subr.bf16.mxu0 0
        %2297 = vmatpush1.bf16.msra.mxu0 0
        %2298 = vmatprep.subr.bf16.mxu0 0
        %2299 = vmatpush1.bf16.msra.mxu0 0
        %2300 = vmatprep.subr.bf16.mxu0 0
        %2301 = vmatpush1.bf16.msra.mxu0 0
        %2302 = vmatprep.subr.bf16.mxu0 0
        %2303 = vmatpush1.bf16.msra.mxu0 0
        %2304 = vmatprep.subr.bf16.mxu0 0
        %2305 = vmatpush1.bf16.msra.mxu0 0
        %2306 = vmatprep.subr.bf16.mxu0 0
        %2307 = vmatpush1.bf16.msra.mxu0 0
        %2308 = vmatprep.subr.bf16.mxu0 0
        %2309 = vmatpush1.bf16.msra.mxu0 0
        %2310 = vmatprep.subr.bf16.mxu0 0
        %2311 = vmatpush1.bf16.msra.mxu0 0
        %2312 = vmatprep.mubr.bf16.mxu0 0
        %2313 = vmatmul.mubr.bf16.gmra.mrb[0].mxu0 %v2278
        %v2314 = vpop.f32.mrb[0].mxu0
        %v2315 = vadd.f32 0.0, %v2314
        %v2316 = vpop.f32.mrb[0].mxu0
        %v2317 = vpop.f32.mrb[0].mxu0
        %v2318 = vadd.f32 0.0, %v2317
        %v2319 = vpop.f32.mrb[0].mxu0
        %2320 = vdwg.mxu0
        %v2322 = vsel %vm1788, %v2231, 0
        %2324 = vmatprep.subr.bf16.mxu0 0
        %2325 = vmatpush1.bf16.msra.mxu0 %v1645
        %2326 = vmatprep.subr.bf16.mxu0 0
        %2327 = vmatpush1.bf16.msra.mxu0 0
        %2328 = vmatprep.subr.bf16.mxu0 0
        %2329 = vmatpush1.bf16.msra.mxu0 0
        %2330 = vmatprep.subr.bf16.mxu0 0
        %2331 = vmatpush1.bf16.msra.mxu0 0
        %2332 = vmatprep.subr.bf16.mxu0 0
        %2333 = vmatpush1.bf16.msra.mxu0 0
        %2334 = vmatprep.subr.bf16.mxu0 0
        %2335 = vmatpush1.bf16.msra.mxu0 0
        %2336 = vmatprep.subr.bf16.mxu0 0
        %2337 = vmatpush1.bf16.msra.mxu0 0
        %2338 = vmatprep.subr.bf16.mxu0 0
        %2339 = vmatpush1.bf16.msra.mxu0 0
        %2340 = vmatprep.subr.bf16.mxu0 0
        %2341 = vmatpush1.bf16.msra.mxu0 0
        %2342 = vmatprep.subr.bf16.mxu0 0
        %2343 = vmatpush1.bf16.msra.mxu0 0
        %2344 = vmatprep.subr.bf16.mxu0 0
        %2345 = vmatpush1.bf16.msra.mxu0 0
        %2346 = vmatprep.subr.bf16.mxu0 0
        %2347 = vmatpush1.bf16.msra.mxu0 0
        %2348 = vmatprep.subr.bf16.mxu0 0
        %2349 = vmatpush1.bf16.msra.mxu0 0
        %2350 = vmatprep.subr.bf16.mxu0 0
        %2351 = vmatpush1.bf16.msra.mxu0 0
        %2352 = vmatprep.subr.bf16.mxu0 0
        %2353 = vmatpush1.bf16.msra.mxu0 0
        %2354 = vmatprep.subr.bf16.mxu0 0
        %2355 = vmatpush1.bf16.msra.mxu0 0
        %2356 = vmatprep.mubr.bf16.mxu0 0
        %2357 = vmatmul.mubr.bf16.gmra.mrb[0].mxu0 %v2322
        %v2358 = vpop.f32.mrb[0].mxu0
        %v2359 = vadd.f32 0.0, %v2358
        %v2360 = vpop.f32.mrb[0].mxu0
        %v2361 = vpop.f32.mrb[0].mxu0
        %v2362 = vadd.f32 0.0, %v2361
        %v2363 = vpop.f32.mrb[0].mxu0
        %2364 = vdwg.mxu0
        %v2366 = vsel %vm1788, %v2232, 0
        %2368 = vmatprep.subr.bf16.mxu0 0
        %2369 = vmatpush1.bf16.msra.mxu0 %v1646
        %2370 = vmatprep.subr.bf16.mxu0 0
        %2371 = vmatpush1.bf16.msra.mxu0 0
        %2372 = vmatprep.subr.bf16.mxu0 0
        %2373 = vmatpush1.bf16.msra.mxu0 0
        %2374 = vmatprep.subr.bf16.mxu0 0
        %2375 = vmatpush1.bf16.msra.mxu0 0
        %2376 = vmatprep.subr.bf16.mxu0 0
        %2377 = vmatpush1.bf16.msra.mxu0 0
        %2378 = vmatprep.subr.bf16.mxu0 0
        %2379 = vmatpush1.bf16.msra.mxu0 0
        %2380 = vmatprep.subr.bf16.mxu0 0
        %2381 = vmatpush1.bf16.msra.mxu0 0
        %2382 = vmatprep.subr.bf16.mxu0 0
        %2383 = vmatpush1.bf16.msra.mxu0 0
        %2384 = vmatprep.subr.bf16.mxu0 0
        %2385 = vmatpush1.bf16.msra.mxu0 0
        %2386 = vmatprep.subr.bf16.mxu0 0
        %2387 = vmatpush1.bf16.msra.mxu0 0
        %2388 = vmatprep.subr.bf16.mxu0 0
        %2389 = vmatpush1.bf16.msra.mxu0 0
        %2390 = vmatprep.subr.bf16.mxu0 0
        %2391 = vmatpush1.bf16.msra.mxu0 0
        %2392 = vmatprep.subr.bf16.mxu0 0
        %2393 = vmatpush1.bf16.msra.mxu0 0
        %2394 = vmatprep.subr.bf16.mxu0 0
        %2395 = vmatpush1.bf16.msra.mxu0 0
        %2396 = vmatprep.subr.bf16.mxu0 0
        %2397 = vmatpush1.bf16.msra.mxu0 0
        %2398 = vmatprep.subr.bf16.mxu0 0
        %2399 = vmatpush1.bf16.msra.mxu0 0
        %2400 = vmatprep.mubr.bf16.mxu0 0
        %2401 = vmatmul.mubr.bf16.gmra.mrb[0].mxu0 %v2366
        %v2402 = vpop.f32.mrb[0].mxu0
        %v2403 = vadd.f32 0.0, %v2402
        %v2404 = vpop.f32.mrb[0].mxu0
        %v2405 = vpop.f32.mrb[0].mxu0
        %v2406 = vadd.f32 0.0, %v2405
        %v2407 = vpop.f32.mrb[0].mxu0
        %2408 = vdwg.mxu0
        %2411 = vrot.lane.b32.xlu0 %v2315, 32
        %v2412 = vpop.permute.xlu0 %2411
        %2413 = vrot.lane.b32.xlu0 %v2318, 32
        %v2414 = vpop.permute.xlu0 %2413
        %2419 = vrot.lane.b32.xlu0 %v2359, 64
        %v2420 = vpop.permute.xlu0 %2419
        %2421 = vrot.lane.b32.xlu0 %v2362, 64
        %v2422 = vpop.permute.xlu0 %2421
        %2427 = vrot.lane.b32.xlu0 %v2403, 96
        %v2428 = vpop.permute.xlu0 %2427
        %2429 = vrot.lane.b32.xlu0 %v2406, 96
        %v2430 = vpop.permute.xlu0 %2429
        %v2433 = vsel %vm1933, %v2271, %v2412
        %v2434 = vsel %vm1933, %v2274, %v2414
        %vm2435 = vcmask 523264
        %v2436 = vsel %vm2435, %v2433, %v2420
        %v2437 = vsel %vm2435, %v2434, %v2422
        %vm2438 = vcmask 785408
        %v2439 = vsel %vm2438, %v2436, %v2428
        %v2440 = vsel %vm2438, %v2437, %v2430
        %v2441 = vpack.c.bf16 %v2440, %v2439
        %v2442 = vld [vmem:[%s6] sm:$0xf]
        %v2443 = vld [vmem:[%s6 + $0x4] sm:$0xf]
        %v2444 = vld [vmem:[%s6 + $0x8] sm:$0xf]
        %v2445 = vld [vmem:[%s6 + $0xc] sm:$0xf]
        %v2446 = vld [vmem:[%s6 + $0x10] sm:$0xf]
        %v2447 = vld [vmem:[%s6 + $0x14] sm:$0xf]
        %v2448 = vld [vmem:[%s6 + $0x18] sm:$0xf]
        %v2449 = vld [vmem:[%s6 + $0x1c] sm:$0xf]
        %v2450 = vld [vmem:[%s6 + $0x20] sm:$0xf]
        %v2451 = vld [vmem:[%s6 + $0x24] sm:$0xf]
        %v2452 = vld [vmem:[%s6 + $0x28] sm:$0xf]
        %v2453 = vld [vmem:[%s6 + $0x2c] sm:$0xf]
        %v2454 = vld [vmem:[%s6 + $0x30] sm:$0xf]
        %v2455 = vld [vmem:[%s6 + $0x34] sm:$0xf]
        %v2456 = vld [vmem:[%s6 + $0x38] sm:$0xf]
        %v2457 = vld [vmem:[%s6 + $0x3c] sm:$0xf]
        %v2474 = vunpack.c.l.b16 %v2442
        %v2475 = vunpack.c.l.b16 %v2443
        %v2476 = vunpack.c.l.b16 %v2444
        %v2477 = vunpack.c.l.b16 %v2445
        %v2478 = vunpack.c.l.b16 %v2446
        %v2479 = vunpack.c.l.b16 %v2447
        %v2480 = vunpack.c.l.b16 %v2448
        %v2481 = vunpack.c.l.b16 %v2449
        %v2482 = vunpack.c.l.b16 %v2450
        %v2483 = vunpack.c.l.b16 %v2451
        %v2484 = vunpack.c.l.b16 %v2452
        %v2485 = vunpack.c.l.b16 %v2453
        %v2486 = vunpack.c.l.b16 %v2454
        %v2487 = vunpack.c.l.b16 %v2455
        %v2488 = vunpack.c.l.b16 %v2456
        %v2489 = vunpack.c.l.b16 %v2457
        %v2490 = vpack.c.b16 %v2475, %v2474
        %v2491 = vpack.c.b16 %v2477, %v2476
        %v2492 = vpack.c.b16 %v2479, %v2478
        %v2493 = vpack.c.b16 %v2481, %v2480
        %v2494 = vpack.c.b16 %v2483, %v2482
        %v2495 = vpack.c.b16 %v2485, %v2484
        %v2496 = vpack.c.b16 %v2487, %v2486
        %v2497 = vpack.c.b16 %v2489, %v2488
        %2506 = vmatprep.subr.bf16.mxu0 0
        %2507 = vmatpush1.bf16.msra.mxu0 %v2490
        %2508 = vmatprep.subr.bf16.mxu0 0
        %2509 = vmatpush1.bf16.msra.mxu0 %v2491
        %2510 = vmatprep.subr.bf16.mxu0 0
        %2511 = vmatpush1.bf16.msra.mxu0 %v2492
        %2512 = vmatprep.subr.bf16.mxu0 0
        %2513 = vmatpush1.bf16.msra.mxu0 %v2493
        %2514 = vmatprep.subr.bf16.mxu0 0
        %2515 = vmatpush1.bf16.msra.mxu0 %v2494
        %2516 = vmatprep.subr.bf16.mxu0 0
        %2517 = vmatpush1.bf16.msra.mxu0 %v2495
        %2518 = vmatprep.subr.bf16.mxu0 0
        %2519 = vmatpush1.bf16.msra.mxu0 %v2496
        %2520 = vmatprep.subr.bf16.mxu0 0
        %2521 = vmatpush1.bf16.msra.mxu0 %v2497
        %2522 = vmatprep.subr.bf16.mxu0 0
        %2523 = vmatpush1.bf16.msra.mxu0 0
        %2524 = vmatprep.subr.bf16.mxu0 0
        %2525 = vmatpush1.bf16.msra.mxu0 0
        %2526 = vmatprep.subr.bf16.mxu0 0
        %2527 = vmatpush1.bf16.msra.mxu0 0
        %2528 = vmatprep.subr.bf16.mxu0 0
        %2529 = vmatpush1.bf16.msra.mxu0 0
        %2530 = vmatprep.subr.bf16.mxu0 0
        %2531 = vmatpush1.bf16.msra.mxu0 0
        %2532 = vmatprep.subr.bf16.mxu0 0
        %2533 = vmatpush1.bf16.msra.mxu0 0
        %2534 = vmatprep.subr.bf16.mxu0 0
        %2535 = vmatpush1.bf16.msra.mxu0 0
        %2536 = vmatprep.subr.bf16.mxu0 0
        %2537 = vmatpush1.bf16.msra.mxu0 0
        %2538 = vmatprep.mubr.bf16.mxu0 0
        %2539 = vmatmul.mubr.bf16.gmra.mrb[0].mxu0 %v2441
        %v2540 = vpop.f32.mrb[0].mxu0
        %v2541 = vadd.f32 0.0, %v2540
        %v2542 = vpop.f32.mrb[0].mxu0
        %v2543 = vpop.f32.mrb[0].mxu0
        %v2544 = vadd.f32 0.0, %v2543
        %v2545 = vpop.f32.mrb[0].mxu0
        %2546 = vdwg.mxu0
        %v2547 = vadd.f32 %v477, %v2541
        %v2548 = vadd.f32 %v478, %v2544
        %v2549 = vld [vmem:[%s7] sm:$0x1]
        %v2550 = vld [vmem:[%s8] sm:$0x1]
        %2551 = vadd.xlane.f32.xlu0 %v2547
        %v2552 = vpop.xlane.xlu0 %2551
        %2553 = vadd.xlane.f32.xlu0 %v2548
        %v2554 = vpop.xlane.xlu0 %2553
        %v2555 = vmul.f32 %v2552, %v485
        %v2556 = vmul.f32 %v2554, %v485
        %v2557 = vsub.f32 %v2547, %v2555
        %v2558 = vsub.f32 %v2548, %v2556
        %v2559 = vmul.f32 %v2557, %v2557
        %v2560 = vmul.f32 %v2558, %v2558
        %2561 = vadd.xlane.f32.xlu0 %v2559
        %v2562 = vpop.xlane.xlu0 %2561
        %2563 = vadd.xlane.f32.xlu0 %v2560
        %v2564 = vpop.xlane.xlu0 %2563
        %v2565 = vmul.f32 %v2562, %v485
        %v2566 = vmul.f32 %v2564, %v485
        %v2567 = vadd.f32 %v2565, 1e-05
        %v2568 = vadd.f32 %v2566, 1e-05
        %v2569 = vrsqrt.pop %v2567
        %v2570 = vrsqrt.pop %v2568
        %v2571 = vmul.f32 %v2557, %v2569
        %v2572 = vmul.f32 %v2558, %v2570
        %v2574 = vlaneseq
        %v2575 = vshrl.u32 %v2574, 7
        %v2576 = vsub.s32 0, %v2575
        %v2577 = vrot.slane %v2549, %v2576
        %v2579 = vmul.f32 %v2571, %v2577
        %v2580 = vmul.f32 %v2572, %v2577
        %v2582 = vlaneseq
        %v2583 = vshrl.u32 %v2582, 7
        %v2584 = vsub.s32 0, %v2583
        %v2585 = vrot.slane %v2550, %v2584
        %v2587 = vadd.f32 %v2579, %v2585
        %v2588 = vadd.f32 %v2580, %v2585
        %v2589 = vpack.c.bf16 %v2588, %v2587
        %v2590 = vld [vmem:[#allocation5] sm:$0xff]
        %v2591 = vld [vmem:[#allocation5 + $0x8] sm:$0xff]
        %v2592 = vld [vmem:[#allocation5 + $0x10] sm:$0xff]
        %v2593 = vld [vmem:[#allocation5 + $0x18] sm:$0xff]
        %v2594 = vld [vmem:[#allocation5 + $0x20] sm:$0xff]
        %v2595 = vld [vmem:[#allocation5 + $0x28] sm:$0xff]
        %v2596 = vld [vmem:[#allocation5 + $0x30] sm:$0xff]
        %v2597 = vld [vmem:[#allocation5 + $0x38] sm:$0xff]
        %v2598 = vld [vmem:[#allocation5 + $0x40] sm:$0xff]
        %v2599 = vld [vmem:[#allocation5 + $0x48] sm:$0xff]
        %v2600 = vld [vmem:[#allocation5 + $0x50] sm:$0xff]
        %v2601 = vld [vmem:[#allocation5 + $0x58] sm:$0xff]
        %v2602 = vld [vmem:[#allocation5 + $0x60] sm:$0xff]
        %v2603 = vld [vmem:[#allocation5 + $0x68] sm:$0xff]
        %v2604 = vld [vmem:[#allocation5 + $0x70] sm:$0xff]
        %v2605 = vld [vmem:[#allocation5 + $0x78] sm:$0xff]
        %v2606 = vld [vmem:[#allocation5 + $0x80] sm:$0xff]
        %v2607 = vld [vmem:[#allocation5 + $0x88] sm:$0xff]
        %v2608 = vld [vmem:[#allocation5 + $0x90] sm:$0xff]
        %v2609 = vld [vmem:[#allocation5 + $0x98] sm:$0xff]
        %v2610 = vld [vmem:[#allocation5 + $0xa0] sm:$0xff]
        %v2611 = vld [vmem:[#allocation5 + $0xa8] sm:$0xff]
        %v2612 = vld [vmem:[#allocation5 + $0xb0] sm:$0xff]
        %v2613 = vld [vmem:[#allocation5 + $0xb8] sm:$0xff]
        %v2614 = vld [vmem:[#allocation5 + $0xc0] sm:$0xff]
        %v2615 = vld [vmem:[#allocation5 + $0xc8] sm:$0xff]
        %v2616 = vld [vmem:[#allocation5 + $0xd0] sm:$0xff]
        %v2617 = vld [vmem:[#allocation5 + $0xd8] sm:$0xff]
        %v2618 = vld [vmem:[#allocation5 + $0xe0] sm:$0xff]
        %v2619 = vld [vmem:[#allocation5 + $0xe8] sm:$0xff]
        %v2620 = vld [vmem:[#allocation5 + $0xf0] sm:$0xff]
        %v2621 = vld [vmem:[#allocation5 + $0xf8] sm:$0xff]
        %v2654 = vunpack.c.l.b16 %v2590
        %v2655 = vunpack.c.h.b16 %v2590
        %v2656 = vunpack.c.l.b16 %v2591
        %v2657 = vunpack.c.h.b16 %v2591
        %v2658 = vunpack.c.l.b16 %v2592
        %v2659 = vunpack.c.h.b16 %v2592
        %v2660 = vunpack.c.l.b16 %v2593
        %v2661 = vunpack.c.h.b16 %v2593
        %v2662 = vunpack.c.l.b16 %v2594
        %v2663 = vunpack.c.h.b16 %v2594
        %v2664 = vunpack.c.l.b16 %v2595
        %v2665 = vunpack.c.h.b16 %v2595
        %v2666 = vunpack.c.l.b16 %v2596
        %v2667 = vunpack.c.h.b16 %v2596
        %v2668 = vunpack.c.l.b16 %v2597
        %v2669 = vunpack.c.h.b16 %v2597
        %v2670 = vunpack.c.l.b16 %v2598
        %v2671 = vunpack.c.h.b16 %v2598
        %v2672 = vunpack.c.l.b16 %v2599
        %v2673 = vunpack.c.h.b16 %v2599
        %v2674 = vunpack.c.l.b16 %v2600
        %v2675 = vunpack.c.h.b16 %v2600
        %v2676 = vunpack.c.l.b16 %v2601
        %v2677 = vunpack.c.h.b16 %v2601
        %v2678 = vunpack.c.l.b16 %v2602
        %v2679 = vunpack.c.h.b16 %v2602
        %v2680 = vunpack.c.l.b16 %v2603
        %v2681 = vunpack.c.h.b16 %v2603
        %v2682 = vunpack.c.l.b16 %v2604
        %v2683 = vunpack.c.h.b16 %v2604
        %v2684 = vunpack.c.l.b16 %v2605
        %v2685 = vunpack.c.h.b16 %v2605
        %v2686 = vunpack.c.l.b16 %v2606
        %v2687 = vunpack.c.h.b16 %v2606
        %v2688 = vunpack.c.l.b16 %v2607
        %v2689 = vunpack.c.h.b16 %v2607
        %v2690 = vunpack.c.l.b16 %v2608
        %v2691 = vunpack.c.h.b16 %v2608
        %v2692 = vunpack.c.l.b16 %v2609
        %v2693 = vunpack.c.h.b16 %v2609
        %v2694 = vunpack.c.l.b16 %v2610
        %v2695 = vunpack.c.h.b16 %v2610
        %v2696 = vunpack.c.l.b16 %v2611
        %v2697 = vunpack.c.h.b16 %v2611
        %v2698 = vunpack.c.l.b16 %v2612
        %v2699 = vunpack.c.h.b16 %v2612
        %v2700 = vunpack.c.l.b16 %v2613
        %v2701 = vunpack.c.h.b16 %v2613
        %v2702 = vunpack.c.l.b16 %v2614
        %v2703 = vunpack.c.h.b16 %v2614
        %v2704 = vunpack.c.l.b16 %v2615
        %v2705 = vunpack.c.h.b16 %v2615
        %v2706 = vunpack.c.l.b16 %v2616
        %v2707 = vunpack.c.h.b16 %v2616
        %v2708 = vunpack.c.l.b16 %v2617
        %v2709 = vunpack.c.h.b16 %v2617
        %v2710 = vunpack.c.l.b16 %v2618
        %v2711 = vunpack.c.h.b16 %v2618
        %v2712 = vunpack.c.l.b16 %v2619
        %v2713 = vunpack.c.h.b16 %v2619
        %v2714 = vunpack.c.l.b16 %v2620
        %v2715 = vunpack.c.h.b16 %v2620
        %v2716 = vunpack.c.l.b16 %v2621
        %v2717 = vunpack.c.h.b16 %v2621
        %v2718 = vpack.c.b16 %v2658, %v2654
        %v2719 = vpack.c.b16 %v2659, %v2655
        %v2720 = vpack.c.b16 %v2660, %v2656
        %v2721 = vpack.c.b16 %v2661, %v2657
        %v2722 = vpack.c.b16 %v2666, %v2662
        %v2723 = vpack.c.b16 %v2667, %v2663
        %v2724 = vpack.c.b16 %v2668, %v2664
        %v2725 = vpack.c.b16 %v2669, %v2665
        %v2726 = vpack.c.b16 %v2674, %v2670
        %v2727 = vpack.c.b16 %v2675, %v2671
        %v2728 = vpack.c.b16 %v2676, %v2672
        %v2729 = vpack.c.b16 %v2677, %v2673
        %v2730 = vpack.c.b16 %v2682, %v2678
        %v2731 = vpack.c.b16 %v2683, %v2679
        %v2732 = vpack.c.b16 %v2684, %v2680
        %v2733 = vpack.c.b16 %v2685, %v2681
        %v2734 = vpack.c.b16 %v2690, %v2686
        %v2735 = vpack.c.b16 %v2691, %v2687
        %v2736 = vpack.c.b16 %v2692, %v2688
        %v2737 = vpack.c.b16 %v2693, %v2689
        %v2738 = vpack.c.b16 %v2698, %v2694
        %v2739 = vpack.c.b16 %v2699, %v2695
        %v2740 = vpack.c.b16 %v2700, %v2696
        %v2741 = vpack.c.b16 %v2701, %v2697
        %v2742 = vpack.c.b16 %v2706, %v2702
        %v2743 = vpack.c.b16 %v2707, %v2703
        %v2744 = vpack.c.b16 %v2708, %v2704
        %v2745 = vpack.c.b16 %v2709, %v2705
        %v2746 = vpack.c.b16 %v2714, %v2710
        %v2747 = vpack.c.b16 %v2715, %v2711
        %v2748 = vpack.c.b16 %v2716, %v2712
        %v2749 = vpack.c.b16 %v2717, %v2713
        %2782 = vmatprep.subr.bf16.mxu0 %v2719
        %2783 = vmatpush1.bf16.msra.mxu0 %v2718
        %2784 = vmatprep.subr.bf16.mxu0 %v2723
        %2785 = vmatpush1.bf16.msra.mxu0 %v2722
        %2786 = vmatprep.subr.bf16.mxu0 %v2727
        %2787 = vmatpush1.bf16.msra.mxu0 %v2726
        %2788 = vmatprep.subr.bf16.mxu0 %v2731
        %2789 = vmatpush1.bf16.msra.mxu0 %v2730
        %2790 = vmatprep.subr.bf16.mxu0 %v2735
        %2791 = vmatpush1.bf16.msra.mxu0 %v2734
        %2792 = vmatprep.subr.bf16.mxu0 %v2739
        %2793 = vmatpush1.bf16.msra.mxu0 %v2738
        %2794 = vmatprep.subr.bf16.mxu0 %v2743
        %2795 = vmatpush1.bf16.msra.mxu0 %v2742
        %2796 = vmatprep.subr.bf16.mxu0 %v2747
        %2797 = vmatpush1.bf16.msra.mxu0 %v2746
        %2798 = vmatprep.subr.bf16.mxu0 0
        %2799 = vmatpush1.bf16.msra.mxu0 0
        %2800 = vmatprep.subr.bf16.mxu0 0
        %2801 = vmatpush1.bf16.msra.mxu0 0
        %2802 = vmatprep.subr.bf16.mxu0 0
        %2803 = vmatpush1.bf16.msra.mxu0 0
        %2804 = vmatprep.subr.bf16.mxu0 0
        %2805 = vmatpush1.bf16.msra.mxu0 0
        %2806 = vmatprep.subr.bf16.mxu0 0
        %2807 = vmatpush1.bf16.msra.mxu0 0
        %2808 = vmatprep.subr.bf16.mxu0 0
        %2809 = vmatpush1.bf16.msra.mxu0 0
        %2810 = vmatprep.subr.bf16.mxu0 0
        %2811 = vmatpush1.bf16.msra.mxu0 0
        %2812 = vmatprep.subr.bf16.mxu0 0
        %2813 = vmatpush1.bf16.msra.mxu0 0
        %2814 = vmatprep.mubr.bf16.mxu0 0
        %2815 = vmatmul.mubr.bf16.gmra.mrb[0].mxu0 %v2589
        %v2816 = vpop.f32.mrb[0].mxu0
        %v2817 = vadd.f32 0.0, %v2816
        %v2818 = vpop.f32.mrb[0].mxu0
        %v2819 = vadd.f32 0.0, %v2818
        %v2820 = vpop.f32.mrb[0].mxu0
        %v2821 = vadd.f32 0.0, %v2820
        %v2822 = vpop.f32.mrb[0].mxu0
        %v2823 = vadd.f32 0.0, %v2822
        %2824 = vdwg.mxu0
        %2825 = vmatprep.subr.bf16.mxu0 %v2721
        %2826 = vmatpush1.bf16.msra.mxu0 %v2720
        %2827 = vmatprep.subr.bf16.mxu0 %v2725
        %2828 = vmatpush1.bf16.msra.mxu0 %v2724
        %2829 = vmatprep.subr.bf16.mxu0 %v2729
        %2830 = vmatpush1.bf16.msra.mxu0 %v2728
        %2831 = vmatprep.subr.bf16.mxu0 %v2733
        %2832 = vmatpush1.bf16.msra.mxu0 %v2732
        %2833 = vmatprep.subr.bf16.mxu0 %v2737
        %2834 = vmatpush1.bf16.msra.mxu0 %v2736
        %2835 = vmatprep.subr.bf16.mxu0 %v2741
        %2836 = vmatpush1.bf16.msra.mxu0 %v2740
        %2837 = vmatprep.subr.bf16.mxu0 %v2745
        %2838 = vmatpush1.bf16.msra.mxu0 %v2744
        %2839 = vmatprep.subr.bf16.mxu0 %v2749
        %2840 = vmatpush1.bf16.msra.mxu0 %v2748
        %2841 = vmatprep.subr.bf16.mxu0 0
        %2842 = vmatpush1.bf16.msra.mxu0 0
        %2843 = vmatprep.subr.bf16.mxu0 0
        %2844 = vmatpush1.bf16.msra.mxu0 0
        %2845 = vmatprep.subr.bf16.mxu0 0
        %2846 = vmatpush1.bf16.msra.mxu0 0
        %2847 = vmatprep.subr.bf16.mxu0 0
        %2848 = vmatpush1.bf16.msra.mxu0 0
        %2849 = vmatprep.subr.bf16.mxu0 0
        %2850 = vmatpush1.bf16.msra.mxu0 0
        %2851 = vmatprep.subr.bf16.mxu0 0
        %2852 = vmatpush1.bf16.msra.mxu0 0
        %2853 = vmatprep.subr.bf16.mxu0 0
        %2854 = vmatpush1.bf16.msra.mxu0 0
        %2855 = vmatprep.subr.bf16.mxu0 0
        %2856 = vmatpush1.bf16.msra.mxu0 0
        %2857 = vmatprep.mubr.bf16.mxu0 0
        %2858 = vmatmul.mubr.bf16.gmra.mrb[0].mxu0 %v2589
        %v2859 = vpop.f32.mrb[0].mxu0
        %v2860 = vadd.f32 0.0, %v2859
        %v2861 = vpop.f32.mrb[0].mxu0
        %v2862 = vadd.f32 0.0, %v2861
        %v2863 = vpop.f32.mrb[0].mxu0
        %v2864 = vadd.f32 0.0, %v2863
        %v2865 = vpop.f32.mrb[0].mxu0
        %v2866 = vadd.f32 0.0, %v2865
        %2867 = vdwg.mxu0
        %v2868 = vxor.u32 %v2860, 2147483648
        %v2869 = vxor.u32 %v2862, 2147483648
        %v2870 = vxor.u32 %v2864, 2147483648
        %v2871 = vxor.u32 %v2866, 2147483648
        %v2872 = vmul.f32 %v2868, 1.442695
        %v2873 = vpow.pop %v2872
        %v2874 = vmul.f32 %v2869, 1.442695
        %v2875 = vpow.pop %v2874
        %v2876 = vmul.f32 %v2870, 1.442695
        %v2877 = vpow.pop %v2876
        %v2878 = vmul.f32 %v2871, 1.442695
        %v2879 = vpow.pop %v2878
        %v2880 = vadd.f32 %v2873, 1.0
        %v2881 = vadd.f32 %v2875, 1.0
        %v2882 = vadd.f32 %v2877, 1.0
        %v2883 = vadd.f32 %v2879, 1.0
        %v2884 = vrcp.pop %v2880
        %v2885 = vmul.f32 1.0, %v2884
        %v2886 = vrcp.pop %v2881
        %v2887 = vmul.f32 1.0, %v2886
        %v2888 = vrcp.pop %v2882
        %v2889 = vmul.f32 1.0, %v2888
        %v2890 = vrcp.pop %v2883
        %v2891 = vmul.f32 1.0, %v2890
        %v2892 = vmul.f32 %v2860, %v2885
        %v2893 = vmul.f32 %v2862, %v2887
        %v2894 = vmul.f32 %v2864, %v2889
        %v2895 = vmul.f32 %v2866, %v2891
        %v2896 = vmul.f32 %v2817, %v2892
        %v2897 = vmul.f32 %v2819, %v2893
        %v2898 = vmul.f32 %v2821, %v2894
        %v2899 = vmul.f32 %v2823, %v2895
        %v2900 = vpack.c.bf16 %v2898, %v2896
        %v2901 = vpack.c.bf16 %v2899, %v2897
        %v2902 = vld [vmem:[#allocation7] sm:$0xf]
        %v2903 = vld [vmem:[#allocation7 + $0x4] sm:$0xf]
        %v2904 = vld [vmem:[#allocation7 + $0x8] sm:$0xf]
        %v2905 = vld [vmem:[#allocation7 + $0xc] sm:$0xf]
        %v2906 = vld [vmem:[#allocation7 + $0x10] sm:$0xf]
        %v2907 = vld [vmem:[#allocation7 + $0x14] sm:$0xf]
        %v2908 = vld [vmem:[#allocation7 + $0x18] sm:$0xf]
        %v2909 = vld [vmem:[#allocation7 + $0x1c] sm:$0xf]
        %v2910 = vld [vmem:[#allocation7 + $0x20] sm:$0xf]
        %v2911 = vld [vmem:[#allocation7 + $0x24] sm:$0xf]
        %v2912 = vld [vmem:[#allocation7 + $0x28] sm:$0xf]
        %v2913 = vld [vmem:[#allocation7 + $0x2c] sm:$0xf]
        %v2914 = vld [vmem:[#allocation7 + $0x30] sm:$0xf]
        %v2915 = vld [vmem:[#allocation7 + $0x34] sm:$0xf]
        %v2916 = vld [vmem:[#allocation7 + $0x38] sm:$0xf]
        %v2917 = vld [vmem:[#allocation7 + $0x3c] sm:$0xf]
        %v2918 = vld [vmem:[#allocation7 + $0x40] sm:$0xf]
        %v2919 = vld [vmem:[#allocation7 + $0x44] sm:$0xf]
        %v2920 = vld [vmem:[#allocation7 + $0x48] sm:$0xf]
        %v2921 = vld [vmem:[#allocation7 + $0x4c] sm:$0xf]
        %v2922 = vld [vmem:[#allocation7 + $0x50] sm:$0xf]
        %v2923 = vld [vmem:[#allocation7 + $0x54] sm:$0xf]
        %v2924 = vld [vmem:[#allocation7 + $0x58] sm:$0xf]
        %v2925 = vld [vmem:[#allocation7 + $0x5c] sm:$0xf]
        %v2926 = vld [vmem:[#allocation7 + $0x60] sm:$0xf]
        %v2927 = vld [vmem:[#allocation7 + $0x64] sm:$0xf]
        %v2928 = vld [vmem:[#allocation7 + $0x68] sm:$0xf]
        %v2929 = vld [vmem:[#allocation7 + $0x6c] sm:$0xf]
        %v2930 = vld [vmem:[#allocation7 + $0x70] sm:$0xf]
        %v2931 = vld [vmem:[#allocation7 + $0x74] sm:$0xf]
        %v2932 = vld [vmem:[#allocation7 + $0x78] sm:$0xf]
        %v2933 = vld [vmem:[#allocation7 + $0x7c] sm:$0xf]
        %v2966 = vunpack.c.l.b16 %v2902
        %v2967 = vunpack.c.l.b16 %v2903
        %v2968 = vunpack.c.l.b16 %v2904
        %v2969 = vunpack.c.l.b16 %v2905
        %v2970 = vunpack.c.l.b16 %v2906
        %v2971 = vunpack.c.l.b16 %v2907
        %v2972 = vunpack.c.l.b16 %v2908
        %v2973 = vunpack.c.l.b16 %v2909
        %v2974 = vunpack.c.l.b16 %v2910
        %v2975 = vunpack.c.l.b16 %v2911
        %v2976 = vunpack.c.l.b16 %v2912
        %v2977 = vunpack.c.l.b16 %v2913
        %v2978 = vunpack.c.l.b16 %v2914
        %v2979 = vunpack.c.l.b16 %v2915
        %v2980 = vunpack.c.l.b16 %v2916
        %v2981 = vunpack.c.l.b16 %v2917
        %v2982 = vunpack.c.l.b16 %v2918
        %v2983 = vunpack.c.l.b16 %v2919
        %v2984 = vunpack.c.l.b16 %v2920
        %v2985 = vunpack.c.l.b16 %v2921
        %v2986 = vunpack.c.l.b16 %v2922
        %v2987 = vunpack.c.l.b16 %v2923
        %v2988 = vunpack.c.l.b16 %v2924
        %v2989 = vunpack.c.l.b16 %v2925
        %v2990 = vunpack.c.l.b16 %v2926
        %v2991 = vunpack.c.l.b16 %v2927
        %v2992 = vunpack.c.l.b16 %v2928
        %v2993 = vunpack.c.l.b16 %v2929
        %v2994 = vunpack.c.l.b16 %v2930
        %v2995 = vunpack.c.l.b16 %v2931
        %v2996 = vunpack.c.l.b16 %v2932
        %v2997 = vunpack.c.l.b16 %v2933
        %v2998 = vpack.c.b16 %v2967, %v2966
        %v2999 = vpack.c.b16 %v2969, %v2968
        %v3000 = vpack.c.b16 %v2971, %v2970
        %v3001 = vpack.c.b16 %v2973, %v2972
        %v3002 = vpack.c.b16 %v2975, %v2974
        %v3003 = vpack.c.b16 %v2977, %v2976
        %v3004 = vpack.c.b16 %v2979, %v2978
        %v3005 = vpack.c.b16 %v2981, %v2980
        %v3006 = vpack.c.b16 %v2983, %v2982
        %v3007 = vpack.c.b16 %v2985, %v2984
        %v3008 = vpack.c.b16 %v2987, %v2986
        %v3009 = vpack.c.b16 %v2989, %v2988
        %v3010 = vpack.c.b16 %v2991, %v2990
        %v3011 = vpack.c.b16 %v2993, %v2992
        %v3012 = vpack.c.b16 %v2995, %v2994
        %v3013 = vpack.c.b16 %v2997, %v2996
        %3030 = vmatprep.subr.bf16.mxu0 0
        %3031 = vmatpush1.bf16.msra.mxu0 %v2998
        %3032 = vmatprep.subr.bf16.mxu0 0
        %3033 = vmatpush1.bf16.msra.mxu0 %v2999
        %3034 = vmatprep.subr.bf16.mxu0 0
        %3035 = vmatpush1.bf16.msra.mxu0 %v3000
        %3036 = vmatprep.subr.bf16.mxu0 0
        %3037 = vmatpush1.bf16.msra.mxu0 %v3001
        %3038 = vmatprep.subr.bf16.mxu0 0
        %3039 = vmatpush1.bf16.msra.mxu0 %v3002
        %3040 = vmatprep.subr.bf16.mxu0 0
        %3041 = vmatpush1.bf16.msra.mxu0 %v3003
        %3042 = vmatprep.subr.bf16.mxu0 0
        %3043 = vmatpush1.bf16.msra.mxu0 %v3004
        %3044 = vmatprep.subr.bf16.mxu0 0
        %3045 = vmatpush1.bf16.msra.mxu0 %v3005
        %3046 = vmatprep.subr.bf16.mxu0 0
        %3047 = vmatpush1.bf16.msra.mxu0 %v3006
        %3048 = vmatprep.subr.bf16.mxu0 0
        %3049 = vmatpush1.bf16.msra.mxu0 %v3007
        %3050 = vmatprep.subr.bf16.mxu0 0
        %3051 = vmatpush1.bf16.msra.mxu0 %v3008
        %3052 = vmatprep.subr.bf16.mxu0 0
        %3053 = vmatpush1.bf16.msra.mxu0 %v3009
        %3054 = vmatprep.subr.bf16.mxu0 0
        %3055 = vmatpush1.bf16.msra.mxu0 %v3010
        %3056 = vmatprep.subr.bf16.mxu0 0
        %3057 = vmatpush1.bf16.msra.mxu0 %v3011
        %3058 = vmatprep.subr.bf16.mxu0 0
        %3059 = vmatpush1.bf16.msra.mxu0 %v3012
        %3060 = vmatprep.subr.bf16.mxu0 0
        %3061 = vmatpush1.bf16.msra.mxu0 %v3013
        %3062 = vmatprep.mubr.bf16.mxu0 %v2901
        %3063 = vmatmul.mubr.bf16.gmra.mrb[0].mxu0 %v2900
        %v3064 = vpop.f32.mrb[0].mxu0
        %v3065 = vadd.f32 0.0, %v3064
        %v3066 = vpop.f32.mrb[0].mxu0
        %v3067 = vpop.f32.mrb[0].mxu0
        %v3068 = vadd.f32 0.0, %v3067
        %v3069 = vpop.f32.mrb[0].mxu0
        %3070 = vdwg.mxu0
        %v3071 = vadd.f32 %v2547, %v3065
        %v3072 = vadd.f32 %v2548, %v3068
        %3073 = vst [vmem:[%s456] sm:$0xff] %v3071
        %3074 = vst [vmem:[%s456 + $0x8] sm:$0xff] %v3072
        %s3075 = sand.u32 %s281, 1
        %s3076 = scalar_lea.sflag [#allocation4], %s3075
        %s3077 = sand.u32 %s281, 1
        %s3078 = smul.addr %s3077, 16
        %s3079 = scalar_lea.vmem [#allocation8], %s3078
        // Predicated region
        $region77: #{tpu_custom_call.1} parent=63 // pred_check
          %p3080 = pneg %p291
        $region78: #{tpu_custom_call.1} parent=63 // pred_check_branch
          %3082 = sbr.rel (%p3080) target = $region80
        $region79: #{tpu_custom_call.1} parent=63 // pred_region
          %s3083 = smul.u32 2, %s27
          %s3085 = ssub.s32 256, 256
          %3086 = vsyncadd %s3076, %s3085
          %s3087 = smul.addr %s3083, 128
          %s3088 = scalar_lea.hbm %s11, %s3087
          %s3089 = sshll.u32 %s3079, 4
          %s3090 = int_to_ptr.vmem [resolvable:$true] %s3089
          %3095 = dma.vmem_to_hbm [thread:$0]  %s3090, 256, %s3088, %s3076, 128, 128, 8
        $region80: #{tpu_custom_call.1} parent=63 // pred_fallthru
          _
      $region64: #{tpu_custom_call.1} parent=5 // pred_fallthru
        _
      %p3096 = scmp.le.s32.totalorder 2, %s22
      // Predicated region
      $region81: #{tpu_custom_call.1} parent=5 // pred_check
        %p3097 = pneg %p3096
      $region82: #{tpu_custom_call.1} parent=5 // pred_check_branch
        %3099 = sbr.rel (%p3097) target = $region84
      $region83: #{tpu_custom_call.1} parent=5 // pred_region
        %s3100 = ssub.s32 %s22, 2
        // Predicated region
        $region85: #{tpu_custom_call.1} parent=83 // pred_check
          %p3101 = pneg %p297
        $region86: #{tpu_custom_call.1} parent=83 // pred_check_branch
          %3103 = sbr.rel (%p3101) target = $region88
        $region87: #{tpu_custom_call.1} parent=83 // pred_region
          %s3104 = sand.u32 %s282, 1
          %s3105 = scalar_lea.sflag [#allocation4], %s3104
          %s3106 = sand.u32 %s282, 1
          %s3107 = smul.addr %s3106, 16
          %s3108 = scalar_lea.vmem [#allocation8], %s3107
          %3109 = dma.done %s3105, 256
        $region88: #{tpu_custom_call.1} parent=83 // pred_fallthru
          _
      $region84: #{tpu_custom_call.1} parent=5 // pred_fallthru
        _
    $region6: #{tpu_custom_call.1} parent=1 // loop_footer
      %s26 = sadd.s32 1, %s22
    $region7: #{tpu_custom_call.1} parent=1 // loop_footer_branch
      %21 = sbr.rel target = $region3
    $region8: #{tpu_custom_call.1} parent=1 // loop_exit
      _
    %3110 = vsyncpa [#allocation3], 1
    %s3111 = scalar_lea.sflag [#allocation3], 1
    %3112 = vsyncpa %s3111, 1
    %3113 = vsyncpa [#allocation6], 1
    %3114 = vsyncpa [#allocation4], 1
    %s3115 = scalar_lea.sflag [#allocation4], 1
    %3116 = vsyncpa %s3115, 1

</llo_original>
